<compile_context>
chip_gen: v7x
topology: tpu7x:2x2x1
jax: 0.10.0
libtpu: 0.0.40
codegen_flags: <defaults>
</compile_context>

<pallas_src>
import functools

import jax
import jax.numpy as jnp
import numpy as np
from jax import lax
from jax.experimental import pallas as pl
from jax.experimental.pallas import tpu as pltpu

_EPS = 1e-5
_LANE = 128


def _round_up(x, m):
    return (x + m - 1) // m * m


def _mobilev1_kernel(x_ref, dww_ref, s1_ref, b1_ref, pww_ref, s2_ref, b2_ref,
                     o_ref, xpad_ref, y_ref, *, stride):
    # x_ref  : (1, H, W, Cin)      un-padded input image (one batch element)
    # dww_ref: (9, Cin)            depthwise 3x3 weights, taps flattened ky*3+kx (f32)
    # s1/b1  : (1, Cin)            folded BN1 scale / bias (f32)
    # pww_ref: (Cin, TCO)          pointwise weights tile (bf16, Cout padded to 128x)
    # s2/b2  : (1, TCO)            folded BN2 scale / bias tile (f32)
    # o_ref  : (1, Ho, Wo, TCO)    output tile
    # xpad_ref: VMEM (H+2, W+2, Cin) f32 scratch — zero-padded window
    # y_ref  : VMEM (Ho*Wo, Cin) f32 scratch — depthwise+BN1+ReLU result,
    #          computed once per image (j == 0) and reused for every Cout tile.
    H, W, Cin = x_ref.shape[1], x_ref.shape[2], x_ref.shape[3]
    Ho, Wo, TCO = o_ref.shape[1], o_ref.shape[2], o_ref.shape[3]
    j = pl.program_id(1)  # Cout-tile index (innermost, "arbitrary")

    @pl.when(j == 0)
    def _():
        # Build the zero-padded halo window in VMEM; no padded copy of the
        # activation tensor ever touches HBM.
        xpad_ref[...] = jnp.zeros_like(xpad_ref)
        xpad_ref[1:H + 1, 1:W + 1, :] = x_ref[0].astype(jnp.float32)

        # Depthwise 3x3 conv on the VPU (f32): 9 shifted MACs.  Stride is
        # applied directly at the taps; accumulator is seeded with tap 0.
        acc = None
        for dy in range(3):
            for dx in range(3):
                w = dww_ref[dy * 3 + dx, :]                       # (Cin,)
                if stride == 1:
                    tap = xpad_ref[dy:dy + Ho, dx:dx + Wo, :]
                else:
                    tap = xpad_ref[pl.ds(dy, Ho, stride),
                                   pl.ds(dx, Wo, stride), :]
                term = tap * w
                acc = term if acc is None else acc + term

        # Folded BN1 + ReLU (stays f32 on the VPU).
        y = jnp.maximum(acc * s1_ref[0, :] + b1_ref[0, :], 0.0)
        y_ref[...] = y.reshape(Ho * Wo, Cin)

    # Pointwise 1x1 conv: bf16 x bf16 on the MXU with f32 accumulation.
    z = jnp.dot(y_ref[...].astype(jnp.bfloat16), pww_ref[...],
                preferred_element_type=jnp.float32)
    # Folded BN2 + ReLU.
    z = jnp.maximum(z * s2_ref[0, :] + b2_ref[0, :], 0.0)
    o_ref[...] = z.reshape(1, Ho, Wo, TCO).astype(o_ref.dtype)


def mobilev1_block(x_nchw, params, stride=1):
    """x_nchw: (N, Cin, H, W) float32.  Returns (N, Cout, Ho, Wo) float32."""
    N, Cin, H, W = x_nchw.shape
    Cout = params["pw_w"].shape[0]
    Ho = (H - 1) // stride + 1
    Wo = (W - 1) // stride + 1

    # Lane-dense output channels: pad Cout to a multiple of 128 and tile it.
    cout_pad = _round_up(Cout, _LANE)
    tco = min(cout_pad, 256) if cout_pad % 256 == 0 else _LANE
    n_co = cout_pad // tco

    # NCHW -> NHWC (channels on the lane axis).  The activations are NOT
    # spatially padded here — the halo is built in-kernel in VMEM.
    x_nhwc = jnp.transpose(x_nchw, (0, 2, 3, 1)).astype(jnp.float32)

    # Fold BN into scale/bias (inference semantics).
    s1 = params["bn1_gamma"] / jnp.sqrt(params["bn1_var"] + _EPS)
    b1 = params["bn1_beta"] - params["bn1_mean"] * s1
    s2 = params["bn2_gamma"] / jnp.sqrt(params["bn2_var"] + _EPS)
    b2 = params["bn2_beta"] - params["bn2_mean"] * s2

    # Depthwise weights (Cin,1,3,3) -> (9, Cin) f32 (VPU path stays f32).
    dww = jnp.transpose(params["dw_w"].reshape(Cin, 9), (1, 0))
    # Pointwise weights (Cout,Cin,1,1) -> (Cin, Cout_pad) bf16 (MXU operands).
    pww = jnp.transpose(params["pw_w"].reshape(Cout, Cin), (1, 0))
    pww = jnp.pad(pww, ((0, 0), (0, cout_pad - Cout))).astype(jnp.bfloat16)
    s2p = jnp.pad(s2, (0, cout_pad - Cout)).reshape(1, cout_pad)
    b2p = jnp.pad(b2, (0, cout_pad - Cout)).reshape(1, cout_pad)

    kern = functools.partial(_mobilev1_kernel, stride=stride)
    out_pad = pl.pallas_call(
        kern,
        out_shape=jax.ShapeDtypeStruct((N, Ho, Wo, cout_pad), jnp.float32),
        grid_spec=pltpu.PrefetchScalarGridSpec(
            num_scalar_prefetch=0,
            grid=(N, n_co),
            in_specs=[
                pl.BlockSpec((1, H, W, Cin), lambda n, j: (n, 0, 0, 0)),
                pl.BlockSpec((9, Cin), lambda n, j: (0, 0)),
                pl.BlockSpec((1, Cin), lambda n, j: (0, 0)),
                pl.BlockSpec((1, Cin), lambda n, j: (0, 0)),
                pl.BlockSpec((Cin, tco), lambda n, j: (0, j)),
                pl.BlockSpec((1, tco), lambda n, j: (0, j)),
                pl.BlockSpec((1, tco), lambda n, j: (0, j)),
            ],
            out_specs=pl.BlockSpec((1, Ho, Wo, tco), lambda n, j: (n, 0, 0, j)),
            scratch_shapes=[
                pltpu.VMEM((H + 2, W + 2, Cin), jnp.float32),   # padded window
                pltpu.VMEM((Ho * Wo, Cin), jnp.float32),        # depthwise output
            ],
        ),
        compiler_params=pltpu.CompilerParams(
            # Batch axis is independent -> parallel (megacore on v7x);
            # Cout-tile axis reuses the depthwise scratch -> arbitrary.
            dimension_semantics=("parallel", "arbitrary"),
            # Sized with v7x's 64 MiB physical VMEM in mind; raise for very
            # large spatial layers (which should also get spatial tiling).
            vmem_limit_bytes=32 * 1024 * 1024,
        ),
    )(x_nhwc, dww, s1.reshape(1, Cin), b1.reshape(1, Cin), pww, s2p, b2p)

    # Drop the lane padding and go back to NCHW (slice + transpose fuse in XLA).
    out = out_pad[..., :Cout]
    return jnp.transpose(out, (0, 3, 1, 2))


def make_params(key, in_planes, out_planes):
    ks = jax.random.split(key, 10)
    return {
        "dw_w": 0.2 * jax.random.normal(ks[0], (in_planes, 1, 3, 3), jnp.float32),
        "bn1_gamma": 0.5 + jax.random.uniform(ks[1], (in_planes,), jnp.float32),
        "bn1_beta": 0.1 * jax.random.normal(ks[2], (in_planes,), jnp.float32),
        "bn1_mean": 0.1 * jax.random.normal(ks[3], (in_planes,), jnp.float32),
        "bn1_var": 0.5 + jax.random.uniform(ks[4], (in_planes,), jnp.float32),
        "pw_w": 0.2 * jax.random.normal(ks[5], (out_planes, in_planes, 1, 1),
                                        jnp.float32),
        "bn2_gamma": 0.5 + jax.random.uniform(ks[6], (out_planes,), jnp.float32),
        "bn2_beta": 0.1 * jax.random.normal(ks[7], (out_planes,), jnp.float32),
        "bn2_mean": 0.1 * jax.random.normal(ks[8], (out_planes,), jnp.float32),
        "bn2_var": 0.5 + jax.random.uniform(ks[9], (out_planes,), jnp.float32),
    }


def reference(x, p, stride=1):
    """Plain-JAX f32 reference (matches PyTorch inference semantics)."""
    dw = lax.conv_general_dilated(
        x, p["dw_w"], window_strides=(stride, stride),
        padding=((1, 1), (1, 1)), feature_group_count=x.shape[1],
        dimension_numbers=("NCHW", "OIHW", "NCHW"))
    s1 = (p["bn1_gamma"] / jnp.sqrt(p["bn1_var"] + _EPS)).reshape(1, -1, 1, 1)
    b1 = p["bn1_beta"].reshape(1, -1, 1, 1) - p["bn1_mean"].reshape(1, -1, 1, 1) * s1
    y = jnp.maximum(dw * s1 + b1, 0.0)
    pw = lax.conv_general_dilated(
        y, p["pw_w"], window_strides=(1, 1), padding="VALID",
        dimension_numbers=("NCHW", "OIHW", "NCHW"))
    s2 = (p["bn2_gamma"] / jnp.sqrt(p["bn2_var"] + _EPS)).reshape(1, -1, 1, 1)
    b2 = p["bn2_beta"].reshape(1, -1, 1, 1) - p["bn2_mean"].reshape(1, -1, 1, 1) * s2
    return jnp.maximum(pw * s2 + b2, 0.0)


if __name__ == "__main__":
    key = jax.random.PRNGKey(0)
    # Config 1: small shapes per the module spec.  Config 2 exercises the
    # Cout tiling (grid axis 1 > 1) and the depthwise-scratch reuse.
    configs = [
        dict(N=2, Cin=4, Cout=8, H=16, W=16, stride=1),
        dict(N=1, Cin=8, Cout=384, H=8, W=8, stride=1),
    ]
    for cfg in configs:
        key, kx, kp = jax.random.split(key, 3)
        x = jax.random.normal(kx, (cfg["N"], cfg["Cin"], cfg["H"], cfg["W"]),
                              jnp.float32)
        params = make_params(kp, cfg["Cin"], cfg["Cout"])

        out = jax.block_until_ready(mobilev1_block(x, params, stride=cfg["stride"]))
        ref = jax.block_until_ready(reference(x, params, stride=cfg["stride"]))
        assert out.shape == ref.shape, (out.shape, ref.shape)
        # Tolerance sized for bf16 MXU operands (~2^-8 relative rounding) with
        # f32 accumulation; the depthwise/BN path is exact f32.
        np.testing.assert_allclose(np.asarray(out), np.asarray(ref),
                                   rtol=3e-2, atol=3e-2)
    print("KERNEL_OK")
</pallas_src>

<mosaic_0001>
module attributes {stable_mosaic.version = 11 : i64} {
  func.func @_mobilev1_kernel(%arg0: i32, %arg1: i32, %arg2: memref<1x16x16x4xf32, #tpu.memory_space<vmem>>, %arg3: memref<9x4xf32, #tpu.memory_space<vmem>>, %arg4: memref<1x4xf32, #tpu.memory_space<vmem>>, %arg5: memref<1x4xf32, #tpu.memory_space<vmem>>, %arg6: memref<4x128xbf16, #tpu.memory_space<vmem>>, %arg7: memref<1x128xf32, #tpu.memory_space<vmem>>, %arg8: memref<1x128xf32, #tpu.memory_space<vmem>>, %arg9: memref<1x16x16x128xf32, #tpu.memory_space<vmem>>, %arg10: memref<18x18x4xf32, #tpu.memory_space<vmem>>, %arg11: memref<256x4xf32, #tpu.memory_space<vmem>>) attributes {dimension_semantics = [#tpu.dimension_semantics<parallel>, #tpu.dimension_semantics<arbitrary>], iteration_bounds = array<i64: 2, 1>, scalar_prefetch = 0 : i64, scratch_operands = 2 : i64, tpu.core_type = #tpu.core_type<tc>, window_params = [{transform_indices = @transform_0, window_bounds = array<i64: 1, 16, 16, 4>}, {pipeline_mode = #tpu.pipeline_mode<synchronous>, transform_indices = @transform_1, window_bounds = array<i64: 9, 4>}, {pipeline_mode = #tpu.pipeline_mode<synchronous>, transform_indices = @transform_2, window_bounds = array<i64: 1, 4>}, {pipeline_mode = #tpu.pipeline_mode<synchronous>, transform_indices = @transform_3, window_bounds = array<i64: 1, 4>}, {transform_indices = @transform_4, window_bounds = array<i64: 4, 128>}, {transform_indices = @transform_5, window_bounds = array<i64: 1, 128>}, {transform_indices = @transform_6, window_bounds = array<i64: 1, 128>}, {transform_indices = @transform_7, window_bounds = array<i64: 1, 16, 16, 128>}]} {
    %c0_i32 = arith.constant 0 : i32
    %0 = arith.cmpi eq, %arg1, %c0_i32 : i32
    %1 = arith.extui %0 : i1 to i32
    %c0_i32_0 = arith.constant 0 : i32
    %2 = arith.cmpi ne, %1, %c0_i32_0 : i32
    scf.if %2 {
      %cst_13 = arith.constant 0.000000e+00 : f32
      %21 = vector.broadcast %cst_13 : f32 to vector<18x18x4xf32>
      %c0_14 = arith.constant 0 : index
      %c0_15 = arith.constant 0 : index
      %c0_16 = arith.constant 0 : index
      %22 = vector.load %arg10[%c0_14, %c0_15, %c0_16] : memref<18x18x4xf32, #tpu.memory_space<vmem>>, vector<18x18x4xf32>
      tpu.vector_store %arg10[%c0_14, %c0_15, %c0_16], %21 {strides = array<i32>} : memref<18x18x4xf32, #tpu.memory_space<vmem>>, vector<18x18x4xf32>,
      %c0_17 = arith.constant 0 : index
      %c0_18 = arith.constant 0 : index
      %c0_19 = arith.constant 0 : index
      %c0_20 = arith.constant 0 : index
      %23 = vector.load %arg2[%c0_17, %c0_18, %c0_19, %c0_20] : memref<1x16x16x4xf32, #tpu.memory_space<vmem>>, vector<1x16x16x4xf32>
      %24 = vector.shape_cast %23 : vector<1x16x16x4xf32> to vector<16x16x4xf32>
      %c1 = arith.constant 1 : index
      %c1_21 = arith.constant 1 : index
      %c0_22 = arith.constant 0 : index
      %25 = vector.load %arg10[%c1, %c1_21, %c0_22] : memref<18x18x4xf32, #tpu.memory_space<vmem>>, vector<16x16x4xf32>
      tpu.vector_store %arg10[%c1, %c1_21, %c0_22], %24 {strides = array<i32>} : memref<18x18x4xf32, #tpu.memory_space<vmem>>, vector<16x16x4xf32>,
      %c0_23 = arith.constant 0 : index
      %c0_24 = arith.constant 0 : index
      %26 = vector.load %arg3[%c0_23, %c0_24] : memref<9x4xf32, #tpu.memory_space<vmem>>, vector<1x4xf32>
      %27 = vector.shape_cast %26 : vector<1x4xf32> to vector<4xf32>
      %c0_25 = arith.constant 0 : index
      %c0_26 = arith.constant 0 : index
      %c0_27 = arith.constant 0 : index
      %28 = vector.load %arg10[%c0_25, %c0_26, %c0_27] : memref<18x18x4xf32, #tpu.memory_space<vmem>>, vector<16x16x4xf32>
      %29 = vector.shape_cast %27 : vector<4xf32> to vector<1x1x4xf32>
      %30 = vector.broadcast %29 : vector<1x1x4xf32> to vector<16x16x4xf32>
      %31 = arith.mulf %28, %30 : vector<16x16x4xf32>
      %c1_28 = arith.constant 1 : index
      %c0_29 = arith.constant 0 : index
      %32 = vector.load %arg3[%c1_28, %c0_29] : memref<9x4xf32, #tpu.memory_space<vmem>>, vector<1x4xf32>
      %33 = vector.shape_cast %32 : vector<1x4xf32> to vector<4xf32>
      %c0_30 = arith.constant 0 : index
      %c1_31 = arith.constant 1 : index
      %c0_32 = arith.constant 0 : index
      %34 = vector.load %arg10[%c0_30, %c1_31, %c0_32] : memref<18x18x4xf32, #tpu.memory_space<vmem>>, vector<16x16x4xf32>
      %35 = vector.shape_cast %33 : vector<4xf32> to vector<1x1x4xf32>
      %36 = vector.broadcast %35 : vector<1x1x4xf32> to vector<16x16x4xf32>
      %37 = arith.mulf %34, %36 : vector<16x16x4xf32>
      %38 = arith.addf %31, %37 : vector<16x16x4xf32>
      %c2 = arith.constant 2 : index
      %c0_33 = arith.constant 0 : index
      %39 = vector.load %arg3[%c2, %c0_33] : memref<9x4xf32, #tpu.memory_space<vmem>>, vector<1x4xf32>
      %40 = vector.shape_cast %39 : vector<1x4xf32> to vector<4xf32>
      %c0_34 = arith.constant 0 : index
      %c2_35 = arith.constant 2 : index
      %c0_36 = arith.constant 0 : index
      %41 = vector.load %arg10[%c0_34, %c2_35, %c0_36] : memref<18x18x4xf32, #tpu.memory_space<vmem>>, vector<16x16x4xf32>
      %42 = vector.shape_cast %40 : vector<4xf32> to vector<1x1x4xf32>
      %43 = vector.broadcast %42 : vector<1x1x4xf32> to vector<16x16x4xf32>
      %44 = arith.mulf %41, %43 : vector<16x16x4xf32>
      %45 = arith.addf %38, %44 : vector<16x16x4xf32>
      %c3 = arith.constant 3 : index
      %c0_37 = arith.constant 0 : index
      %46 = vector.load %arg3[%c3, %c0_37] : memref<9x4xf32, #tpu.memory_space<vmem>>, vector<1x4xf32>
      %47 = vector.shape_cast %46 : vector<1x4xf32> to vector<4xf32>
      %c1_38 = arith.constant 1 : index
      %c0_39 = arith.constant 0 : index
      %c0_40 = arith.constant 0 : index
      %48 = vector.load %arg10[%c1_38, %c0_39, %c0_40] : memref<18x18x4xf32, #tpu.memory_space<vmem>>, vector<16x16x4xf32>
      %49 = vector.shape_cast %47 : vector<4xf32> to vector<1x1x4xf32>
      %50 = vector.broadcast %49 : vector<1x1x4xf32> to vector<16x16x4xf32>
      %51 = arith.mulf %48, %50 : vector<16x16x4xf32>
      %52 = arith.addf %45, %51 : vector<16x16x4xf32>
      %c4 = arith.constant 4 : index
      %c0_41 = arith.constant 0 : index
      %53 = vector.load %arg3[%c4, %c0_41] : memref<9x4xf32, #tpu.memory_space<vmem>>, vector<1x4xf32>
      %54 = vector.shape_cast %53 : vector<1x4xf32> to vector<4xf32>
      %c1_42 = arith.constant 1 : index
      %c1_43 = arith.constant 1 : index
      %c0_44 = arith.constant 0 : index
      %55 = vector.load %arg10[%c1_42, %c1_43, %c0_44] : memref<18x18x4xf32, #tpu.memory_space<vmem>>, vector<16x16x4xf32>
      %56 = vector.shape_cast %54 : vector<4xf32> to vector<1x1x4xf32>
      %57 = vector.broadcast %56 : vector<1x1x4xf32> to vector<16x16x4xf32>
      %58 = arith.mulf %55, %57 : vector<16x16x4xf32>
      %59 = arith.addf %52, %58 : vector<16x16x4xf32>
      %c5 = arith.constant 5 : index
      %c0_45 = arith.constant 0 : index
      %60 = vector.load %arg3[%c5, %c0_45] : memref<9x4xf32, #tpu.memory_space<vmem>>, vector<1x4xf32>
      %61 = vector.shape_cast %60 : vector<1x4xf32> to vector<4xf32>
      %c1_46 = arith.constant 1 : index
      %c2_47 = arith.constant 2 : index
      %c0_48 = arith.constant 0 : index
      %62 = vector.load %arg10[%c1_46, %c2_47, %c0_48] : memref<18x18x4xf32, #tpu.memory_space<vmem>>, vector<16x16x4xf32>
      %63 = vector.shape_cast %61 : vector<4xf32> to vector<1x1x4xf32>
      %64 = vector.broadcast %63 : vector<1x1x4xf32> to vector<16x16x4xf32>
      %65 = arith.mulf %62, %64 : vector<16x16x4xf32>
      %66 = arith.addf %59, %65 : vector<16x16x4xf32>
      %c6 = arith.constant 6 : index
      %c0_49 = arith.constant 0 : index
      %67 = vector.load %arg3[%c6, %c0_49] : memref<9x4xf32, #tpu.memory_space<vmem>>, vector<1x4xf32>
      %68 = vector.shape_cast %67 : vector<1x4xf32> to vector<4xf32>
      %c2_50 = arith.constant 2 : index
      %c0_51 = arith.constant 0 : index
      %c0_52 = arith.constant 0 : index
      %69 = vector.load %arg10[%c2_50, %c0_51, %c0_52] : memref<18x18x4xf32, #tpu.memory_space<vmem>>, vector<16x16x4xf32>
      %70 = vector.shape_cast %68 : vector<4xf32> to vector<1x1x4xf32>
      %71 = vector.broadcast %70 : vector<1x1x4xf32> to vector<16x16x4xf32>
      %72 = arith.mulf %69, %71 : vector<16x16x4xf32>
      %73 = arith.addf %66, %72 : vector<16x16x4xf32>
      %c7 = arith.constant 7 : index
      %c0_53 = arith.constant 0 : index
      %74 = vector.load %arg3[%c7, %c0_53] : memref<9x4xf32, #tpu.memory_space<vmem>>, vector<1x4xf32>
      %75 = vector.shape_cast %74 : vector<1x4xf32> to vector<4xf32>
      %c2_54 = arith.constant 2 : index
      %c1_55 = arith.constant 1 : index
      %c0_56 = arith.constant 0 : index
      %76 = vector.load %arg10[%c2_54, %c1_55, %c0_56] : memref<18x18x4xf32, #tpu.memory_space<vmem>>, vector<16x16x4xf32>
      %77 = vector.shape_cast %75 : vector<4xf32> to vector<1x1x4xf32>
      %78 = vector.broadcast %77 : vector<1x1x4xf32> to vector<16x16x4xf32>
      %79 = arith.mulf %76, %78 : vector<16x16x4xf32>
      %80 = arith.addf %73, %79 : vector<16x16x4xf32>
      %c8 = arith.constant 8 : index
      %c0_57 = arith.constant 0 : index
      %81 = vector.load %arg3[%c8, %c0_57] : memref<9x4xf32, #tpu.memory_space<vmem>>, vector<1x4xf32>
      %82 = vector.shape_cast %81 : vector<1x4xf32> to vector<4xf32>
      %c2_58 = arith.constant 2 : index
      %c2_59 = arith.constant 2 : index
      %c0_60 = arith.constant 0 : index
      %83 = vector.load %arg10[%c2_58, %c2_59, %c0_60] : memref<18x18x4xf32, #tpu.memory_space<vmem>>, vector<16x16x4xf32>
      %84 = vector.shape_cast %82 : vector<4xf32> to vector<1x1x4xf32>
      %85 = vector.broadcast %84 : vector<1x1x4xf32> to vector<16x16x4xf32>
      %86 = arith.mulf %83, %85 : vector<16x16x4xf32>
      %87 = arith.addf %80, %86 : vector<16x16x4xf32>
      %c0_61 = arith.constant 0 : index
      %c0_62 = arith.constant 0 : index
      %88 = vector.load %arg4[%c0_61, %c0_62] : memref<1x4xf32, #tpu.memory_space<vmem>>, vector<1x4xf32>
      %89 = vector.shape_cast %88 : vector<1x4xf32> to vector<4xf32>
      %90 = vector.shape_cast %89 : vector<4xf32> to vector<1x1x4xf32>
      %91 = vector.broadcast %90 : vector<1x1x4xf32> to vector<16x16x4xf32>
      %92 = arith.mulf %87, %91 : vector<16x16x4xf32>
      %c0_63 = arith.constant 0 : index
      %c0_64 = arith.constant 0 : index
      %93 = vector.load %arg5[%c0_63, %c0_64] : memref<1x4xf32, #tpu.memory_space<vmem>>, vector<1x4xf32>
      %94 = vector.shape_cast %93 : vector<1x4xf32> to vector<4xf32>
      %95 = vector.shape_cast %94 : vector<4xf32> to vector<1x1x4xf32>
      %96 = vector.broadcast %95 : vector<1x1x4xf32> to vector<16x16x4xf32>
      %97 = arith.addf %92, %96 : vector<16x16x4xf32>
      %cst_65 = arith.constant 0.000000e+00 : f32
      %98 = vector.broadcast %cst_65 : f32 to vector<16x16x4xf32>
      %99 = arith.maximumf %97, %98 : vector<16x16x4xf32>
      %100 = vector.shape_cast %99 : vector<16x16x4xf32> to vector<256x4xf32>
      %c0_66 = arith.constant 0 : index
      %c0_67 = arith.constant 0 : index
      %101 = vector.load %arg11[%c0_66, %c0_67] : memref<256x4xf32, #tpu.memory_space<vmem>>, vector<256x4xf32>
      tpu.vector_store %arg11[%c0_66, %c0_67], %100 {strides = array<i32>} : memref<256x4xf32, #tpu.memory_space<vmem>>, vector<256x4xf32>,
    } else {
    }
    %c0 = arith.constant 0 : index
    %c0_1 = arith.constant 0 : index
    %3 = vector.load %arg11[%c0, %c0_1] : memref<256x4xf32, #tpu.memory_space<vmem>>, vector<256x4xf32>
    %4 = arith.truncf %3 : vector<256x4xf32> to vector<256x4xbf16>
    %c0_2 = arith.constant 0 : index
    %c0_3 = arith.constant 0 : index
    %5 = vector.load %arg6[%c0_2, %c0_3] : memref<4x128xbf16, #tpu.memory_space<vmem>>, vector<4x128xbf16>
    %cst = arith.constant dense<0.000000e+00> : vector<256x128xf32>
    %6 = tpu.matmul %4, %5, %cst {dimension_numbers = #tpu.dot_dimension_numbers<[1], [0], [0], [1], [0, 0, 1, 1], [], []>} : vector<256x4xbf16>, vector<4x128xbf16>, vector<256x128xf32> -> vector<256x128xf32>
    %c0_4 = arith.constant 0 : index
    %c0_5 = arith.constant 0 : index
    %7 = vector.load %arg7[%c0_4, %c0_5] : memref<1x128xf32, #tpu.memory_space<vmem>>, vector<1x128xf32>
    %8 = vector.shape_cast %7 : vector<1x128xf32> to vector<128xf32>
    %9 = vector.shape_cast %8 : vector<128xf32> to vector<1x128xf32>
    %10 = vector.broadcast %9 : vector<1x128xf32> to vector<256x128xf32>
    %11 = arith.mulf %6, %10 : vector<256x128xf32>
    %c0_6 = arith.constant 0 : index
    %c0_7 = arith.constant 0 : index
    %12 = vector.load %arg8[%c0_6, %c0_7] : memref<1x128xf32, #tpu.memory_space<vmem>>, vector<1x128xf32>
    %13 = vector.shape_cast %12 : vector<1x128xf32> to vector<128xf32>
    %14 = vector.shape_cast %13 : vector<128xf32> to vector<1x128xf32>
    %15 = vector.broadcast %14 : vector<1x128xf32> to vector<256x128xf32>
    %16 = arith.addf %11, %15 : vector<256x128xf32>
    %cst_8 = arith.constant 0.000000e+00 : f32
    %17 = vector.broadcast %cst_8 : f32 to vector<256x128xf32>
    %18 = arith.maximumf %16, %17 : vector<256x128xf32>
    %19 = vector.shape_cast %18 : vector<256x128xf32> to vector<1x16x16x128xf32>
    %c0_9 = arith.constant 0 : index
    %c0_10 = arith.constant 0 : index
    %c0_11 = arith.constant 0 : index
    %c0_12 = arith.constant 0 : index
    %20 = vector.load %arg9[%c0_9, %c0_10, %c0_11, %c0_12] : memref<1x16x16x128xf32, #tpu.memory_space<vmem>>, vector<1x16x16x128xf32>
    tpu.vector_store %arg9[%c0_9, %c0_10, %c0_11, %c0_12], %19 {strides = array<i32>} : memref<1x16x16x128xf32, #tpu.memory_space<vmem>>, vector<1x16x16x128xf32>,
    return
  }
  func.func @transform_0(%arg0: i32, %arg1: i32) -> (i32, i32, i32, i32) {
    %c0_i32 = arith.constant 0 : i32
    %c0_i32_0 = arith.constant 0 : i32
    %c0_i32_1 = arith.constant 0 : i32
    %c0_i32_2 = arith.constant 0 : i32
    return %arg0, %c0_i32, %c0_i32_0, %c0_i32_1 : i32, i32, i32, i32
  }
  func.func @transform_1(%arg0: i32, %arg1: i32) -> (i32, i32) {
    %c0_i32 = arith.constant 0 : i32
    %c0_i32_0 = arith.constant 0 : i32
    %c0_i32_1 = arith.constant 0 : i32
    return %c0_i32, %c0_i32_0 : i32, i32
  }
  func.func @transform_2(%arg0: i32, %arg1: i32) -> (i32, i32) {
    %c0_i32 = arith.constant 0 : i32
    %c0_i32_0 = arith.constant 0 : i32
    %c0_i32_1 = arith.constant 0 : i32
    return %c0_i32, %c0_i32_0 : i32, i32
  }
  func.func @transform_3(%arg0: i32, %arg1: i32) -> (i32, i32) {
    %c0_i32 = arith.constant 0 : i32
    %c0_i32_0 = arith.constant 0 : i32
    %c0_i32_1 = arith.constant 0 : i32
    return %c0_i32, %c0_i32_0 : i32, i32
  }
  func.func @transform_4(%arg0: i32, %arg1: i32) -> (i32, i32) {
    %c0_i32 = arith.constant 0 : i32
    %c0_i32_0 = arith.constant 0 : i32
    return %c0_i32, %arg1 : i32, i32
  }
  func.func @transform_5(%arg0: i32, %arg1: i32) -> (i32, i32) {
    %c0_i32 = arith.constant 0 : i32
    %c0_i32_0 = arith.constant 0 : i32
    return %c0_i32, %arg1 : i32, i32
  }
  func.func @transform_6(%arg0: i32, %arg1: i32) -> (i32, i32) {
    %c0_i32 = arith.constant 0 : i32
    %c0_i32_0 = arith.constant 0 : i32
    return %c0_i32, %arg1 : i32, i32
  }
  func.func @transform_7(%arg0: i32, %arg1: i32) -> (i32, i32, i32, i32) {
    %c0_i32 = arith.constant 0 : i32
    %c0_i32_0 = arith.constant 0 : i32
    %c0_i32_1 = arith.constant 0 : i32
    return %arg0, %c0_i32, %c0_i32_0, %arg1 : i32, i32, i32, i32
  }
}

</mosaic_0001>

<llo_original>
// kernel: tpu_custom_call.1
$region0: #{tpu_custom_call.1}
  #allocation0 [shape = 'u32[]', space=smem, size = 0x4, offset = 0x4, fixed_abs, tag = 'smem constant byte address 0x4 - core index']
  #allocation1 [shape = 'u32[144,128]{1,0:T(1,128)}', space=vmem, size = 0x12000, scoped, tag = 'internal scratch']
  #allocation2 [shape = 'f32[18,18,4]{2,1,0:T(8,128)}', space=vmem, size = 0x36000, scoped, tag = 'scratch operand']
  #allocation3 [shape = 'f32[256,4]{1,0:T(8,128)}', space=vmem, size = 0x20000, scoped, tag = 'scratch operand']
  %s0 = inlined_call_operand.vmem [shape: f32[2,16,16,4], index: 0, kind: input, shape index: {}]
  %s1 = inlined_call_operand.vmem [shape: f32[9,4], index: 1, kind: input, shape index: {}]
  %s2 = inlined_call_operand.vmem [shape: f32[1,4], index: 2, kind: input, shape index: {}]
  %s3 = inlined_call_operand.vmem [shape: f32[1,4], index: 3, kind: input, shape index: {}]
  %s4 = inlined_call_operand.vmem [shape: bf16[4,128], index: 4, kind: input, shape index: {}]
  %s5 = inlined_call_operand.vmem [shape: f32[1,128], index: 5, kind: input, shape index: {}]
  %s6 = inlined_call_operand.vmem [shape: f32[1,128], index: 6, kind: input, shape index: {}]
  %s7 = inlined_call_operand.hbm [shape: f32[2,16,16,128], index: 7, kind: output, shape index: {}]
  %s8 = sld [smem:[#allocation0]]
  $region65: #{tpu_custom_call.1} parent=0
    _
  %s10 = ssub.s32 1, %s8
  %s11 = scalar_select 0, %s10, %s8
  $region1: #{tpu_custom_call.1} parent=0
    #allocation4 [shape = 'u8[262144]{0}', space=vmem, size = 0x40000, scoped, tag = 'output window, operand 0']
    #allocation5 [shape = 's32[2]{0}', space=sflag, size = 0x8, scoped, tag = 'scoped memory for tpu_custom_call.1']
    %12 = vsyncpa [#allocation5], 0
    %s13 = scalar_lea.sflag [#allocation5], 1
    %14 = vsyncpa %s13, 0
    loop: start=0, step=1, limit=4
    $region2: #{tpu_custom_call.1} parent=1 // loop_pre_header
      _
    $region3: #{tpu_custom_call.1} parent=1 // loop_header
      %s16 = sphi 0, %s20
      %p17 = scmp.ge.s32.totalorder %s16, 4
      %s23 = sphi 0, %s35
      %s24 = sphi 0, %s31
      %s25 = sphi 0, %s23
      %s26 = sphi 0, %s24
      %s27 = sphi 0, %s25
      %s28 = sphi 0, %s26
      %s38 = sphi 0, %s40
      %s41 = sphi 0, %s38
      %s42 = sphi 0, %s41
      %s58 = sphi 0, %s42
      %s62 = sphi 0, %s62
      %s64 = sphi 0, %s62
      %s65 = sphi 0, %s64
      %s79 = sphi 0, %s65
      %s83 = sphi 0, %s83
      %s85 = sphi 0, %s83
      %s86 = sphi 0, %s85
      %s100 = sphi 0, %s86
      %s104 = sphi 0, %s104
      %s106 = sphi 0, %s104
      %s107 = sphi 0, %s106
      %s121 = sphi 0, %s107
      %s127 = sphi 0, %s129
      %s130 = sphi 0, %s127
      %s131 = sphi 0, %s130
      %s147 = sphi 0, %s131
      %s153 = sphi 0, %s155
      %s156 = sphi 0, %s153
      %s157 = sphi 0, %s156
      %s173 = sphi 0, %s157
      %s179 = sphi 0, %s181
      %s182 = sphi 0, %s179
      %s183 = sphi 0, %s182
      %s199 = sphi 0, %s183
      %s207 = sphi 0, %s209
      %s210 = sphi 0, %s207
      %s211 = sphi 0, %s210
      %s227 = sphi 0, %s211
    $region4: #{tpu_custom_call.1} parent=1 // loop_header_branch
      %19 = sbr.rel (%p17) target = $region8
    $region5: #{tpu_custom_call.1} parent=1 // loop_body
      %s21 = ssub.s32 %s16, 1
      %s22 = ssub.s32 %s16, 2
      %s29 = sadd.s32 1, %s24
      %p30 = scmp.ge.s32.totalorder %s29, 1
      %s31 = scalar_select %p30, 0, %s29
      %s32 = sadd.s32 1, %s23
      %s33 = scalar_select %p30, %s32, %s23
      %p34 = scmp.ge.s32.totalorder %s33, 2
      %s35 = scalar_select %p34, 0, %s33
      %s36 = ssub.s32 %s23, %s35
      %p37 = scmp.eq.s32.totalorder %s36, 0
      %s39 = sadd.s32 %s38, 1
      %s40 = scalar_select %p37, %s38, %s39
      %p43 = pneg %p37
      %p44 = scmp.eq.s32.totalorder %s16, 1
      %p45 = por %p43, %p44
      %p46 = scmp.ne.s32.totalorder %s38, %s41
      %p47 = scmp.eq.s32.totalorder %s16, 0
      %p48 = por %p46, %p47
      %p49 = scmp.ne.s32.totalorder %s38, %s41
      %p50 = scmp.eq.s32.totalorder %s21, 1
      %p51 = por %p49, %p50
      %p52 = scmp.ne.s32.totalorder %s41, %s42
      %p53 = scmp.eq.s32.totalorder %s21, 0
      %p54 = por %p52, %p53
      %p55 = scmp.ne.s32.totalorder %s41, %s42
      %p56 = scmp.eq.s32.totalorder %s22, 1
      %p57 = por %p55, %p56
      %p59 = scmp.ne.s32.totalorder %s42, %s58
      %p60 = scmp.eq.s32.totalorder %s22, 0
      %p61 = por %p59, %p60
      %s63 = sadd.s32 %s62, 1
      %p66 = scmp.eq.s32.totalorder %s16, 1
      %p67 = scmp.ne.s32.totalorder %s62, %s64
      %p68 = scmp.eq.s32.totalorder %s16, 0
      %p69 = por %p67, %p68
      %p70 = scmp.ne.s32.totalorder %s62, %s64
      %p71 = scmp.eq.s32.totalorder %s21, 1
      %p72 = por %p70, %p71
      %p73 = scmp.ne.s32.totalorder %s64, %s65
      %p74 = scmp.eq.s32.totalorder %s21, 0
      %p75 = por %p73, %p74
      %p76 = scmp.ne.s32.totalorder %s64, %s65
      %p77 = scmp.eq.s32.totalorder %s22, 1
      %p78 = por %p76, %p77
      %p80 = scmp.ne.s32.totalorder %s65, %s79
      %p81 = scmp.eq.s32.totalorder %s22, 0
      %p82 = por %p80, %p81
      %s84 = sadd.s32 %s83, 1
      %p87 = scmp.eq.s32.totalorder %s16, 1
      %p88 = scmp.ne.s32.totalorder %s83, %s85
      %p89 = scmp.eq.s32.totalorder %s16, 0
      %p90 = por %p88, %p89
      %p91 = scmp.ne.s32.totalorder %s83, %s85
      %p92 = scmp.eq.s32.totalorder %s21, 1
      %p93 = por %p91, %p92
      %p94 = scmp.ne.s32.totalorder %s85, %s86
      %p95 = scmp.eq.s32.totalorder %s21, 0
      %p96 = por %p94, %p95
      %p97 = scmp.ne.s32.totalorder %s85, %s86
      %p98 = scmp.eq.s32.totalorder %s22, 1
      %p99 = por %p97, %p98
      %p101 = scmp.ne.s32.totalorder %s86, %s100
      %p102 = scmp.eq.s32.totalorder %s22, 0
      %p103 = por %p101, %p102
      %s105 = sadd.s32 %s104, 1
      %p108 = scmp.eq.s32.totalorder %s16, 1
      %p109 = scmp.ne.s32.totalorder %s104, %s106
      %p110 = scmp.eq.s32.totalorder %s16, 0
      %p111 = por %p109, %p110
      %p112 = scmp.ne.s32.totalorder %s104, %s106
      %p113 = scmp.eq.s32.totalorder %s21, 1
      %p114 = por %p112, %p113
      %p115 = scmp.ne.s32.totalorder %s106, %s107
      %p116 = scmp.eq.s32.totalorder %s21, 0
      %p117 = por %p115, %p116
      %p118 = scmp.ne.s32.totalorder %s106, %s107
      %p119 = scmp.eq.s32.totalorder %s22, 1
      %p120 = por %p118, %p119
      %p122 = scmp.ne.s32.totalorder %s107, %s121
      %p123 = scmp.eq.s32.totalorder %s22, 0
      %p124 = por %p122, %p123
      %s125 = ssub.s32 %s24, %s31
      %p126 = scmp.eq.s32.totalorder %s125, 0
      %s128 = sadd.s32 %s127, 1
      %s129 = scalar_select %p126, %s127, %s128
      %p132 = pneg %p126
      %p133 = scmp.eq.s32.totalorder %s16, 1
      %p134 = por %p132, %p133
      %p135 = scmp.ne.s32.totalorder %s127, %s130
      %p136 = scmp.eq.s32.totalorder %s16, 0
      %p137 = por %p135, %p136
      %p138 = scmp.ne.s32.totalorder %s127, %s130
      %p139 = scmp.eq.s32.totalorder %s21, 1
      %p140 = por %p138, %p139
      %p141 = scmp.ne.s32.totalorder %s130, %s131
      %p142 = scmp.eq.s32.totalorder %s21, 0
      %p143 = por %p141, %p142
      %p144 = scmp.ne.s32.totalorder %s130, %s131
      %p145 = scmp.eq.s32.totalorder %s22, 1
      %p146 = por %p144, %p145
      %p148 = scmp.ne.s32.totalorder %s131, %s147
      %p149 = scmp.eq.s32.totalorder %s22, 0
      %p150 = por %p148, %p149
      %s151 = ssub.s32 %s24, %s31
      %p152 = scmp.eq.s32.totalorder %s151, 0
      %s154 = sadd.s32 %s153, 1
      %s155 = scalar_select %p152, %s153, %s154
      %p158 = pneg %p152
      %p159 = scmp.eq.s32.totalorder %s16, 1
      %p160 = por %p158, %p159
      %p161 = scmp.ne.s32.totalorder %s153, %s156
      %p162 = scmp.eq.s32.totalorder %s16, 0
      %p163 = por %p161, %p162
      %p164 = scmp.ne.s32.totalorder %s153, %s156
      %p165 = scmp.eq.s32.totalorder %s21, 1
      %p166 = por %p164, %p165
      %p167 = scmp.ne.s32.totalorder %s156, %s157
      %p168 = scmp.eq.s32.totalorder %s21, 0
      %p169 = por %p167, %p168
      %p170 = scmp.ne.s32.totalorder %s156, %s157
      %p171 = scmp.eq.s32.totalorder %s22, 1
      %p172 = por %p170, %p171
      %p174 = scmp.ne.s32.totalorder %s157, %s173
      %p175 = scmp.eq.s32.totalorder %s22, 0
      %p176 = por %p174, %p175
      %s177 = ssub.s32 %s24, %s31
      %p178 = scmp.eq.s32.totalorder %s177, 0
      %s180 = sadd.s32 %s179, 1
      %s181 = scalar_select %p178, %s179, %s180
      %p184 = pneg %p178
      %p185 = scmp.eq.s32.totalorder %s16, 1
      %p186 = por %p184, %p185
      %p187 = scmp.ne.s32.totalorder %s179, %s182
      %p188 = scmp.eq.s32.totalorder %s16, 0
      %p189 = por %p187, %p188
      %p190 = scmp.ne.s32.totalorder %s179, %s182
      %p191 = scmp.eq.s32.totalorder %s21, 1
      %p192 = por %p190, %p191
      %p193 = scmp.ne.s32.totalorder %s182, %s183
      %p194 = scmp.eq.s32.totalorder %s21, 0
      %p195 = por %p193, %p194
      %p196 = scmp.ne.s32.totalorder %s182, %s183
      %p197 = scmp.eq.s32.totalorder %s22, 1
      %p198 = por %p196, %p197
      %p200 = scmp.ne.s32.totalorder %s183, %s199
      %p201 = scmp.eq.s32.totalorder %s22, 0
      %p202 = por %p200, %p201
      %s203 = ssub.s32 %s23, %s35
      %s204 = ssub.s32 %s24, %s31
      %s205 = sor.u32 %s203, %s204
      %p206 = scmp.eq.s32.totalorder %s205, 0
      %s208 = sadd.s32 %s207, 1
      %s209 = scalar_select %p206, %s207, %s208
      %p212 = pneg %p206
      %p213 = scmp.eq.s32.totalorder %s16, 1
      %p214 = por %p212, %p213
      %p215 = scmp.ne.s32.totalorder %s207, %s210
      %p216 = scmp.eq.s32.totalorder %s16, 0
      %p217 = por %p215, %p216
      %p218 = scmp.ne.s32.totalorder %s207, %s210
      %p219 = scmp.eq.s32.totalorder %s21, 1
      %p220 = por %p218, %p219
      %p221 = scmp.ne.s32.totalorder %s210, %s211
      %p222 = scmp.eq.s32.totalorder %s21, 0
      %p223 = por %p221, %p222
      %p224 = scmp.ne.s32.totalorder %s210, %s211
      %p225 = scmp.eq.s32.totalorder %s22, 1
      %p226 = por %p224, %p225
      %p228 = scmp.ne.s32.totalorder %s211, %s227
      %p229 = scmp.eq.s32.totalorder %s22, 0
      %p230 = por %p228, %p229
      %p231 = scmp.le.s32.totalorder 1, %s16
      %p232 = scmp.lt.s32.totalorder %s16, 3
      %p233 = pnand %p231, %p232
      %p234 = pneg %p233
      // Predicated region
      $region9: #{tpu_custom_call.1} parent=5 // pred_check
        _
      $region10: #{tpu_custom_call.1} parent=5 // pred_check_branch
        %236 = sbr.rel (%p233) target = $region12
      $region11: #{tpu_custom_call.1} parent=5 // pred_region
        %s237 = ssub.s32 %s16, 1
        // Predicated region
        $region13: #{tpu_custom_call.1} parent=11 // pred_check
          %p238 = pneg %p75
        $region14: #{tpu_custom_call.1} parent=11 // pred_check_branch
          %240 = sbr.rel (%p238) target = $region16
        $region15: #{tpu_custom_call.1} parent=11 // pred_region
          _
        $region16: #{tpu_custom_call.1} parent=11 // pred_fallthru
          _
        // Predicated region
        $region17: #{tpu_custom_call.1} parent=11 // pred_check
          %p241 = pneg %p96
        $region18: #{tpu_custom_call.1} parent=11 // pred_check_branch
          %243 = sbr.rel (%p241) target = $region20
        $region19: #{tpu_custom_call.1} parent=11 // pred_region
          _
        $region20: #{tpu_custom_call.1} parent=11 // pred_fallthru
          _
        // Predicated region
        $region21: #{tpu_custom_call.1} parent=11 // pred_check
          %p244 = pneg %p117
        $region22: #{tpu_custom_call.1} parent=11 // pred_check_branch
          %246 = sbr.rel (%p244) target = $region24
        $region23: #{tpu_custom_call.1} parent=11 // pred_region
          _
        $region24: #{tpu_custom_call.1} parent=11 // pred_fallthru
          _
        // Predicated region
        $region25: #{tpu_custom_call.1} parent=11 // pred_check
          %p247 = pneg %p143
        $region26: #{tpu_custom_call.1} parent=11 // pred_check_branch
          %249 = sbr.rel (%p247) target = $region28
        $region27: #{tpu_custom_call.1} parent=11 // pred_region
          %p250 = scmp.lt.s32.totalorder %s26, 0
          %s251 = scalar_select %p250, %s26, 0
          %s252 = smul.addr %s251, 2
          %s253 = scalar_lea.vmem %s4, %s252
        $region28: #{tpu_custom_call.1} parent=11 // pred_fallthru
          _
        // Predicated region
        $region29: #{tpu_custom_call.1} parent=11 // pred_check
          %p254 = pneg %p169
        $region30: #{tpu_custom_call.1} parent=11 // pred_check_branch
          %256 = sbr.rel (%p254) target = $region32
        $region31: #{tpu_custom_call.1} parent=11 // pred_region
          %p257 = scmp.lt.s32.totalorder %s26, 0
          %s258 = scalar_select %p257, %s26, 0
          %s259 = scalar_lea.vmem %s5, %s258
        $region32: #{tpu_custom_call.1} parent=11 // pred_fallthru
          _
        // Predicated region
        $region33: #{tpu_custom_call.1} parent=11 // pred_check
          %p260 = pneg %p195
        $region34: #{tpu_custom_call.1} parent=11 // pred_check_branch
          %262 = sbr.rel (%p260) target = $region36
        $region35: #{tpu_custom_call.1} parent=11 // pred_region
          %p263 = scmp.lt.s32.totalorder %s26, 0
          %s264 = scalar_select %p263, %s26, 0
          %s265 = scalar_lea.vmem %s6, %s264
        $region36: #{tpu_custom_call.1} parent=11 // pred_fallthru
          _
      $region12: #{tpu_custom_call.1} parent=5 // pred_fallthru
        _
      %p266 = scmp.lt.s32.totalorder %s16, 2
      // Predicated region
      $region37: #{tpu_custom_call.1} parent=5 // pred_check
        %p267 = pneg %p266
      $region38: #{tpu_custom_call.1} parent=5 // pred_check_branch
        %269 = sbr.rel (%p267) target = $region40
      $region39: #{tpu_custom_call.1} parent=5 // pred_region
        // Predicated region
        $region41: #{tpu_custom_call.1} parent=39 // pred_check
          %p270 = pneg %p48
        $region42: #{tpu_custom_call.1} parent=39 // pred_check_branch
          %272 = sbr.rel (%p270) target = $region44
        $region43: #{tpu_custom_call.1} parent=39 // pred_region
          %p273 = scmp.lt.s32.totalorder %s23, 1
          %s274 = scalar_select %p273, %s23, 1
          %s275 = smul.addr %s274, 32
          %s276 = smul.addr %s275, 8
          %s277 = scalar_lea.vmem %s0, %s276
        $region44: #{tpu_custom_call.1} parent=39 // pred_fallthru
          _
      $region40: #{tpu_custom_call.1} parent=5 // pred_fallthru
        _
      %p278 = scmp.le.s32.totalorder 1, %s16
      %p279 = scmp.lt.s32.totalorder %s16, 3
      %p280 = pnand %p278, %p279
      %p281 = pneg %p280
      // Predicated region
      $region45: #{tpu_custom_call.1} parent=5 // pred_check
        _
      $region46: #{tpu_custom_call.1} parent=5 // pred_check_branch
        %283 = sbr.rel (%p280) target = $region48
      $region47: #{tpu_custom_call.1} parent=5 // pred_region
        %s284 = ssub.s32 %s16, 1
        %p285 = scmp.lt.s32.totalorder %s25, 1
        %s286 = scalar_select %p285, %s25, 1
        %s287 = smul.addr %s286, 32
        %s288 = smul.addr %s287, 8
        %s289 = scalar_lea.vmem %s0, %s288
        %p290 = pneg %p54
        %p291 = pneg %p51
        %p292 = pneg %p75
        %p293 = pneg %p72
        %p294 = pneg %p96
        %p295 = pneg %p93
        %p296 = pneg %p117
        %p297 = pneg %p114
        %p298 = scmp.lt.s32.totalorder %s26, 0
        %s299 = scalar_select %p298, %s26, 0
        %s300 = smul.addr %s299, 2
        %s301 = scalar_lea.vmem %s4, %s300
        %p302 = pneg %p143
        %p303 = pneg %p140
        %p304 = scmp.lt.s32.totalorder %s26, 0
        %s305 = scalar_select %p304, %s26, 0
        %s306 = scalar_lea.vmem %s5, %s305
        %p307 = pneg %p169
        %p308 = pneg %p166
        %p309 = scmp.lt.s32.totalorder %s26, 0
        %s310 = scalar_select %p309, %s26, 0
        %s311 = scalar_lea.vmem %s6, %s310
        %p312 = pneg %p195
        %p313 = pneg %p192
        %p314 = pneg %p223
        %p315 = pneg %p220
        %s316 = sand.u32 %s210, 1
        %s317 = scalar_lea.sflag [#allocation5], %s316
        %s318 = sand.u32 %s210, 1
        %s319 = smul.addr %s318, 256
        %s320 = scalar_lea.vmem [#allocation4], %s319
        %p321 = scmp.lt.s32.totalorder %s25, 1
        %s322 = scalar_select %p321, %s25, 1
        %s323 = smul.addr %s322, 32
        %s324 = smul.addr %s323, 8
        %s325 = scalar_lea.vmem %s0, %s324
        %p326 = scmp.lt.s32.totalorder %s26, 0
        %s327 = scalar_select %p326, %s26, 0
        %s328 = smul.addr %s327, 2
        %s329 = scalar_lea.vmem %s4, %s328
        %p330 = scmp.lt.s32.totalorder %s26, 0
        %s331 = scalar_select %p330, %s26, 0
        %s332 = scalar_lea.vmem %s5, %s331
        %p333 = scmp.lt.s32.totalorder %s26, 0
        %s334 = scalar_select %p333, %s26, 0
        %s335 = scalar_lea.vmem %s6, %s334
        %p337 = scmp.eq.s32.totalorder %s26, 0
        // Predicated region
        $region49: #{tpu_custom_call.1} parent=47 // pred_check
          %p338 = pneg %p337
        $region50: #{tpu_custom_call.1} parent=47 // pred_check_branch
          %340 = sbr.rel (%p338) target = $region52
        $region51: #{tpu_custom_call.1} parent=47 // pred_region
          %vm341 = vcmask 31744
          %342 = vst.msk [vmem:[#allocation2] sm:$0xff] %vm341, 0.0
          %343 = vst.msk [vmem:[#allocation2 + $0x8] sm:$0xff] %vm341, 0.0
          %vm344 = vcmask 25600
          %345 = vst.msk [vmem:[#allocation2 + $0x10] sm:$0x3] %vm344, 0.0
          %346 = vst.msk [vmem:[#allocation2 + $0x18] sm:$0xff] %vm341, 0.0
          %347 = vst.msk [vmem:[#allocation2 + $0x20] sm:$0xff] %vm341, 0.0
          %348 = vst.msk [vmem:[#allocation2 + $0x28] sm:$0x3] %vm344, 0.0
          %349 = vst.msk [vmem:[#allocation2 + $0x30] sm:$0xff] %vm341, 0.0
          %350 = vst.msk [vmem:[#allocation2 + $0x38] sm:$0xff] %vm341, 0.0
          %351 = vst.msk [vmem:[#allocation2 + $0x40] sm:$0x3] %vm344, 0.0
          %352 = vst.msk [vmem:[#allocation2 + $0x48] sm:$0xff] %vm341, 0.0
          %353 = vst.msk [vmem:[#allocation2 + $0x50] sm:$0xff] %vm341, 0.0
          %354 = vst.msk [vmem:[#allocation2 + $0x58] sm:$0x3] %vm344, 0.0
          %355 = vst.msk [vmem:[#allocation2 + $0x60] sm:$0xff] %vm341, 0.0
          %356 = vst.msk [vmem:[#allocation2 + $0x68] sm:$0xff] %vm341, 0.0
          %357 = vst.msk [vmem:[#allocation2 + $0x70] sm:$0x3] %vm344, 0.0
          %358 = vst.msk [vmem:[#allocation2 + $0x78] sm:$0xff] %vm341, 0.0
          %359 = vst.msk [vmem:[#allocation2 + $0x80] sm:$0xff] %vm341, 0.0
          %360 = vst.msk [vmem:[#allocation2 + $0x88] sm:$0x3] %vm344, 0.0
          %361 = vst.msk [vmem:[#allocation2 + $0x90] sm:$0xff] %vm341, 0.0
          %362 = vst.msk [vmem:[#allocation2 + $0x98] sm:$0xff] %vm341, 0.0
          %363 = vst.msk [vmem:[#allocation2 + $0xa0] sm:$0x3] %vm344, 0.0
          %364 = vst.msk [vmem:[#allocation2 + $0xa8] sm:$0xff] %vm341, 0.0
          %365 = vst.msk [vmem:[#allocation2 + $0xb0] sm:$0xff] %vm341, 0.0
          %366 = vst.msk [vmem:[#allocation2 + $0xb8] sm:$0x3] %vm344, 0.0
          %367 = vst.msk [vmem:[#allocation2 + $0xc0] sm:$0xff] %vm341, 0.0
          %368 = vst.msk [vmem:[#allocation2 + $0xc8] sm:$0xff] %vm341, 0.0
          %369 = vst.msk [vmem:[#allocation2 + $0xd0] sm:$0x3] %vm344, 0.0
          %370 = vst.msk [vmem:[#allocation2 + $0xd8] sm:$0xff] %vm341, 0.0
          %371 = vst.msk [vmem:[#allocation2 + $0xe0] sm:$0xff] %vm341, 0.0
          %372 = vst.msk [vmem:[#allocation2 + $0xe8] sm:$0x3] %vm344, 0.0
          %373 = vst.msk [vmem:[#allocation2 + $0xf0] sm:$0xff] %vm341, 0.0
          %374 = vst.msk [vmem:[#allocation2 + $0xf8] sm:$0xff] %vm341, 0.0
          %375 = vst.msk [vmem:[#allocation2 + $0x100] sm:$0x3] %vm344, 0.0
          %376 = vst.msk [vmem:[#allocation2 + $0x108] sm:$0xff] %vm341, 0.0
          %377 = vst.msk [vmem:[#allocation2 + $0x110] sm:$0xff] %vm341, 0.0
          %378 = vst.msk [vmem:[#allocation2 + $0x118] sm:$0x3] %vm344, 0.0
          %379 = vst.msk [vmem:[#allocation2 + $0x120] sm:$0xff] %vm341, 0.0
          %380 = vst.msk [vmem:[#allocation2 + $0x128] sm:$0xff] %vm341, 0.0
          %381 = vst.msk [vmem:[#allocation2 + $0x130] sm:$0x3] %vm344, 0.0
          %382 = vst.msk [vmem:[#allocation2 + $0x138] sm:$0xff] %vm341, 0.0
          %383 = vst.msk [vmem:[#allocation2 + $0x140] sm:$0xff] %vm341, 0.0
          %384 = vst.msk [vmem:[#allocation2 + $0x148] sm:$0x3] %vm344, 0.0
          %385 = vst.msk [vmem:[#allocation2 + $0x150] sm:$0xff] %vm341, 0.0
          %386 = vst.msk [vmem:[#allocation2 + $0x158] sm:$0xff] %vm341, 0.0
          %387 = vst.msk [vmem:[#allocation2 + $0x160] sm:$0x3] %vm344, 0.0
          %388 = vst.msk [vmem:[#allocation2 + $0x168] sm:$0xff] %vm341, 0.0
          %389 = vst.msk [vmem:[#allocation2 + $0x170] sm:$0xff] %vm341, 0.0
          %390 = vst.msk [vmem:[#allocation2 + $0x178] sm:$0x3] %vm344, 0.0
          %391 = vst.msk [vmem:[#allocation2 + $0x180] sm:$0xff] %vm341, 0.0
          %392 = vst.msk [vmem:[#allocation2 + $0x188] sm:$0xff] %vm341, 0.0
          %393 = vst.msk [vmem:[#allocation2 + $0x190] sm:$0x3] %vm344, 0.0
          %394 = vst.msk [vmem:[#allocation2 + $0x198] sm:$0xff] %vm341, 0.0
          %395 = vst.msk [vmem:[#allocation2 + $0x1a0] sm:$0xff] %vm341, 0.0
          %396 = vst.msk [vmem:[#allocation2 + $0x1a8] sm:$0x3] %vm344, 0.0
          %v397 = vld [vmem:[%s325] sm:$0xff]
          %v398 = vld [vmem:[%s325 + $0x8] sm:$0xff]
          %v399 = vld [vmem:[%s325 + $0x10] sm:$0xff]
          %v400 = vld [vmem:[%s325 + $0x18] sm:$0xff]
          %v401 = vld [vmem:[%s325 + $0x20] sm:$0xff]
          %v402 = vld [vmem:[%s325 + $0x28] sm:$0xff]
          %v403 = vld [vmem:[%s325 + $0x30] sm:$0xff]
          %v404 = vld [vmem:[%s325 + $0x38] sm:$0xff]
          %v405 = vld [vmem:[%s325 + $0x40] sm:$0xff]
          %v406 = vld [vmem:[%s325 + $0x48] sm:$0xff]
          %v407 = vld [vmem:[%s325 + $0x50] sm:$0xff]
          %v408 = vld [vmem:[%s325 + $0x58] sm:$0xff]
          %v409 = vld [vmem:[%s325 + $0x60] sm:$0xff]
          %v410 = vld [vmem:[%s325 + $0x68] sm:$0xff]
          %v411 = vld [vmem:[%s325 + $0x70] sm:$0xff]
          %v412 = vld [vmem:[%s325 + $0x78] sm:$0xff]
          %v413 = vld [vmem:[%s325 + $0x80] sm:$0xff]
          %v414 = vld [vmem:[%s325 + $0x88] sm:$0xff]
          %v415 = vld [vmem:[%s325 + $0x90] sm:$0xff]
          %v416 = vld [vmem:[%s325 + $0x98] sm:$0xff]
          %v417 = vld [vmem:[%s325 + $0xa0] sm:$0xff]
          %v418 = vld [vmem:[%s325 + $0xa8] sm:$0xff]
          %v419 = vld [vmem:[%s325 + $0xb0] sm:$0xff]
          %v420 = vld [vmem:[%s325 + $0xb8] sm:$0xff]
          %v421 = vld [vmem:[%s325 + $0xc0] sm:$0xff]
          %v422 = vld [vmem:[%s325 + $0xc8] sm:$0xff]
          %v423 = vld [vmem:[%s325 + $0xd0] sm:$0xff]
          %v424 = vld [vmem:[%s325 + $0xd8] sm:$0xff]
          %v425 = vld [vmem:[%s325 + $0xe0] sm:$0xff]
          %v426 = vld [vmem:[%s325 + $0xe8] sm:$0xff]
          %v427 = vld [vmem:[%s325 + $0xf0] sm:$0xff]
          %v428 = vld [vmem:[%s325 + $0xf8] sm:$0xff]
          %s429 = scalar_lea.vmem [#allocation2], 24
          %430 = vst.msk [vmem:[%s429 + $0x1] sm:$0xff] %vm341, %v397
          %431 = vst.msk [vmem:[%s429 + $0x9] sm:$0xff] %vm341, %v398
          %432 = vst.msk [vmem:[%s429 + $0x19] sm:$0xff] %vm341, %v399
          %433 = vst.msk [vmem:[%s429 + $0x21] sm:$0xff] %vm341, %v400
          %434 = vst.msk [vmem:[%s429 + $0x31] sm:$0xff] %vm341, %v401
          %435 = vst.msk [vmem:[%s429 + $0x39] sm:$0xff] %vm341, %v402
          %436 = vst.msk [vmem:[%s429 + $0x49] sm:$0xff] %vm341, %v403
          %437 = vst.msk [vmem:[%s429 + $0x51] sm:$0xff] %vm341, %v404
          %438 = vst.msk [vmem:[%s429 + $0x61] sm:$0xff] %vm341, %v405
          %439 = vst.msk [vmem:[%s429 + $0x69] sm:$0xff] %vm341, %v406
          %440 = vst.msk [vmem:[%s429 + $0x79] sm:$0xff] %vm341, %v407
          %441 = vst.msk [vmem:[%s429 + $0x81] sm:$0xff] %vm341, %v408
          %442 = vst.msk [vmem:[%s429 + $0x91] sm:$0xff] %vm341, %v409
          %443 = vst.msk [vmem:[%s429 + $0x99] sm:$0xff] %vm341, %v410
          %444 = vst.msk [vmem:[%s429 + $0xa9] sm:$0xff] %vm341, %v411
          %445 = vst.msk [vmem:[%s429 + $0xb1] sm:$0xff] %vm341, %v412
          %446 = vst.msk [vmem:[%s429 + $0xc1] sm:$0xff] %vm341, %v413
          %447 = vst.msk [vmem:[%s429 + $0xc9] sm:$0xff] %vm341, %v414
          %448 = vst.msk [vmem:[%s429 + $0xd9] sm:$0xff] %vm341, %v415
          %449 = vst.msk [vmem:[%s429 + $0xe1] sm:$0xff] %vm341, %v416
          %450 = vst.msk [vmem:[%s429 + $0xf1] sm:$0xff] %vm341, %v417
          %451 = vst.msk [vmem:[%s429 + $0xf9] sm:$0xff] %vm341, %v418
          %452 = vst.msk [vmem:[%s429 + $0x109] sm:$0xff] %vm341, %v419
          %453 = vst.msk [vmem:[%s429 + $0x111] sm:$0xff] %vm341, %v420
          %454 = vst.msk [vmem:[%s429 + $0x121] sm:$0xff] %vm341, %v421
          %455 = vst.msk [vmem:[%s429 + $0x129] sm:$0xff] %vm341, %v422
          %456 = vst.msk [vmem:[%s429 + $0x139] sm:$0xff] %vm341, %v423
          %457 = vst.msk [vmem:[%s429 + $0x141] sm:$0xff] %vm341, %v424
          %458 = vst.msk [vmem:[%s429 + $0x151] sm:$0xff] %vm341, %v425
          %459 = vst.msk [vmem:[%s429 + $0x159] sm:$0xff] %vm341, %v426
          %460 = vst.msk [vmem:[%s429 + $0x169] sm:$0xff] %vm341, %v427
          %461 = vst.msk [vmem:[%s429 + $0x171] sm:$0xff] %vm341, %v428
          %v462 = vld [vmem:[%s1] sm:$0x1]
          %v463 = vld [vmem:[#allocation2] sm:$0xff]
          %v464 = vld [vmem:[#allocation2 + $0x8] sm:$0xff]
          %v465 = vld [vmem:[#allocation2 + $0x18] sm:$0xff]
          %v466 = vld [vmem:[#allocation2 + $0x20] sm:$0xff]
          %v467 = vld [vmem:[#allocation2 + $0x30] sm:$0xff]
          %v468 = vld [vmem:[#allocation2 + $0x38] sm:$0xff]
          %v469 = vld [vmem:[#allocation2 + $0x48] sm:$0xff]
          %v470 = vld [vmem:[#allocation2 + $0x50] sm:$0xff]
          %v471 = vld [vmem:[#allocation2 + $0x60] sm:$0xff]
          %v472 = vld [vmem:[#allocation2 + $0x68] sm:$0xff]
          %v473 = vld [vmem:[#allocation2 + $0x78] sm:$0xff]
          %v474 = vld [vmem:[#allocation2 + $0x80] sm:$0xff]
          %v475 = vld [vmem:[#allocation2 + $0x90] sm:$0xff]
          %v476 = vld [vmem:[#allocation2 + $0x98] sm:$0xff]
          %v477 = vld [vmem:[#allocation2 + $0xa8] sm:$0xff]
          %v478 = vld [vmem:[#allocation2 + $0xb0] sm:$0xff]
          %v479 = vld [vmem:[#allocation2 + $0xc0] sm:$0xff]
          %v480 = vld [vmem:[#allocation2 + $0xc8] sm:$0xff]
          %v481 = vld [vmem:[#allocation2 + $0xd8] sm:$0xff]
          %v482 = vld [vmem:[#allocation2 + $0xe0] sm:$0xff]
          %v483 = vld [vmem:[#allocation2 + $0xf0] sm:$0xff]
          %v484 = vld [vmem:[#allocation2 + $0xf8] sm:$0xff]
          %v485 = vld [vmem:[#allocation2 + $0x108] sm:$0xff]
          %v486 = vld [vmem:[#allocation2 + $0x110] sm:$0xff]
          %v487 = vld [vmem:[#allocation2 + $0x120] sm:$0xff]
          %v488 = vld [vmem:[#allocation2 + $0x128] sm:$0xff]
          %v489 = vld [vmem:[#allocation2 + $0x138] sm:$0xff]
          %v490 = vld [vmem:[#allocation2 + $0x140] sm:$0xff]
          %v491 = vld [vmem:[#allocation2 + $0x150] sm:$0xff]
          %v492 = vld [vmem:[#allocation2 + $0x158] sm:$0xff]
          %v493 = vld [vmem:[#allocation2 + $0x168] sm:$0xff]
          %v494 = vld [vmem:[#allocation2 + $0x170] sm:$0xff]
          %v495 = vlaneseq
          %v496 = vshrl.u32 %v495, 7
          %v497 = vsub.s32 0, %v496
          %v498 = vrot.slane %v462, %v497
          %v499 = vmul.f32 %v463, %v498
          %v500 = vmul.f32 %v464, %v498
          %v501 = vmul.f32 %v465, %v498
          %v502 = vmul.f32 %v466, %v498
          %v503 = vmul.f32 %v467, %v498
          %v504 = vmul.f32 %v468, %v498
          %v505 = vmul.f32 %v469, %v498
          %v506 = vmul.f32 %v470, %v498
          %v507 = vmul.f32 %v471, %v498
          %v508 = vmul.f32 %v472, %v498
          %v509 = vmul.f32 %v473, %v498
          %v510 = vmul.f32 %v474, %v498
          %v511 = vmul.f32 %v475, %v498
          %v512 = vmul.f32 %v476, %v498
          %v513 = vmul.f32 %v477, %v498
          %v514 = vmul.f32 %v478, %v498
          %v515 = vmul.f32 %v479, %v498
          %v516 = vmul.f32 %v480, %v498
          %v517 = vmul.f32 %v481, %v498
          %v518 = vmul.f32 %v482, %v498
          %v519 = vmul.f32 %v483, %v498
          %v520 = vmul.f32 %v484, %v498
          %v521 = vmul.f32 %v485, %v498
          %v522 = vmul.f32 %v486, %v498
          %v523 = vmul.f32 %v487, %v498
          %v524 = vmul.f32 %v488, %v498
          %v525 = vmul.f32 %v489, %v498
          %v526 = vmul.f32 %v490, %v498
          %v527 = vmul.f32 %v491, %v498
          %v528 = vmul.f32 %v492, %v498
          %v529 = vmul.f32 %v493, %v498
          %v530 = vmul.f32 %v494, %v498
          %v531 = vld [vmem:[%s1 + $0x1] sm:$0x1]
          %v532 = vld [vmem:[#allocation2 + $0x1] sm:$0xff]
          %v533 = vld [vmem:[#allocation2 + $0x9] sm:$0xff]
          %v534 = vld [vmem:[#allocation2 + $0x19] sm:$0xff]
          %v535 = vld [vmem:[#allocation2 + $0x21] sm:$0xff]
          %v536 = vld [vmem:[#allocation2 + $0x31] sm:$0xff]
          %v537 = vld [vmem:[#allocation2 + $0x39] sm:$0xff]
          %v538 = vld [vmem:[#allocation2 + $0x49] sm:$0xff]
          %v539 = vld [vmem:[#allocation2 + $0x51] sm:$0xff]
          %v540 = vld [vmem:[#allocation2 + $0x61] sm:$0xff]
          %v541 = vld [vmem:[#allocation2 + $0x69] sm:$0xff]
          %v542 = vld [vmem:[#allocation2 + $0x79] sm:$0xff]
          %v543 = vld [vmem:[#allocation2 + $0x81] sm:$0xff]
          %v544 = vld [vmem:[#allocation2 + $0x91] sm:$0xff]
          %v545 = vld [vmem:[#allocation2 + $0x99] sm:$0xff]
          %v546 = vld [vmem:[#allocation2 + $0xa9] sm:$0xff]
          %v547 = vld [vmem:[#allocation2 + $0xb1] sm:$0xff]
          %v548 = vld [vmem:[#allocation2 + $0xc1] sm:$0xff]
          %v549 = vld [vmem:[#allocation2 + $0xc9] sm:$0xff]
          %v550 = vld [vmem:[#allocation2 + $0xd9] sm:$0xff]
          %v551 = vld [vmem:[#allocation2 + $0xe1] sm:$0xff]
          %v552 = vld [vmem:[#allocation2 + $0xf1] sm:$0xff]
          %v553 = vld [vmem:[#allocation2 + $0xf9] sm:$0xff]
          %v554 = vld [vmem:[#allocation2 + $0x109] sm:$0xff]
          %v555 = vld [vmem:[#allocation2 + $0x111] sm:$0xff]
          %v556 = vld [vmem:[#allocation2 + $0x121] sm:$0xff]
          %v557 = vld [vmem:[#allocation2 + $0x129] sm:$0xff]
          %v558 = vld [vmem:[#allocation2 + $0x139] sm:$0xff]
          %v559 = vld [vmem:[#allocation2 + $0x141] sm:$0xff]
          %v560 = vld [vmem:[#allocation2 + $0x151] sm:$0xff]
          %v561 = vld [vmem:[#allocation2 + $0x159] sm:$0xff]
          %v562 = vld [vmem:[#allocation2 + $0x169] sm:$0xff]
          %v563 = vld [vmem:[#allocation2 + $0x171] sm:$0xff]
          %v564 = vlaneseq
          %v565 = vshrl.u32 %v564, 7
          %v566 = vsub.s32 0, %v565
          %v567 = vrot.slane %v531, %v566
          %v568 = vmul.f32 %v532, %v567
          %v569 = vmul.f32 %v533, %v567
          %v570 = vmul.f32 %v534, %v567
          %v571 = vmul.f32 %v535, %v567
          %v572 = vmul.f32 %v536, %v567
          %v573 = vmul.f32 %v537, %v567
          %v574 = vmul.f32 %v538, %v567
          %v575 = vmul.f32 %v539, %v567
          %v576 = vmul.f32 %v540, %v567
          %v577 = vmul.f32 %v541, %v567
          %v578 = vmul.f32 %v542, %v567
          %v579 = vmul.f32 %v543, %v567
          %v580 = vmul.f32 %v544, %v567
          %v581 = vmul.f32 %v545, %v567
          %v582 = vmul.f32 %v546, %v567
          %v583 = vmul.f32 %v547, %v567
          %v584 = vmul.f32 %v548, %v567
          %v585 = vmul.f32 %v549, %v567
          %v586 = vmul.f32 %v550, %v567
          %v587 = vmul.f32 %v551, %v567
          %v588 = vmul.f32 %v552, %v567
          %v589 = vmul.f32 %v553, %v567
          %v590 = vmul.f32 %v554, %v567
          %v591 = vmul.f32 %v555, %v567
          %v592 = vmul.f32 %v556, %v567
          %v593 = vmul.f32 %v557, %v567
          %v594 = vmul.f32 %v558, %v567
          %v595 = vmul.f32 %v559, %v567
          %v596 = vmul.f32 %v560, %v567
          %v597 = vmul.f32 %v561, %v567
          %v598 = vmul.f32 %v562, %v567
          %v599 = vmul.f32 %v563, %v567
          %v600 = vadd.f32 %v499, %v568
          %v601 = vadd.f32 %v500, %v569
          %v602 = vadd.f32 %v501, %v570
          %v603 = vadd.f32 %v502, %v571
          %v604 = vadd.f32 %v503, %v572
          %v605 = vadd.f32 %v504, %v573
          %v606 = vadd.f32 %v505, %v574
          %v607 = vadd.f32 %v506, %v575
          %v608 = vadd.f32 %v507, %v576
          %v609 = vadd.f32 %v508, %v577
          %v610 = vadd.f32 %v509, %v578
          %v611 = vadd.f32 %v510, %v579
          %v612 = vadd.f32 %v511, %v580
          %v613 = vadd.f32 %v512, %v581
          %v614 = vadd.f32 %v513, %v582
          %v615 = vadd.f32 %v514, %v583
          %v616 = vadd.f32 %v515, %v584
          %v617 = vadd.f32 %v516, %v585
          %v618 = vadd.f32 %v517, %v586
          %v619 = vadd.f32 %v518, %v587
          %v620 = vadd.f32 %v519, %v588
          %v621 = vadd.f32 %v520, %v589
          %v622 = vadd.f32 %v521, %v590
          %v623 = vadd.f32 %v522, %v591
          %v624 = vadd.f32 %v523, %v592
          %v625 = vadd.f32 %v524, %v593
          %v626 = vadd.f32 %v525, %v594
          %v627 = vadd.f32 %v526, %v595
          %v628 = vadd.f32 %v527, %v596
          %v629 = vadd.f32 %v528, %v597
          %v630 = vadd.f32 %v529, %v598
          %v631 = vadd.f32 %v530, %v599
          %v632 = vld [vmem:[%s1 + $0x2] sm:$0x1]
          %v633 = vld [vmem:[#allocation2 + $0x2] sm:$0xff]
          %v634 = vld [vmem:[#allocation2 + $0xa] sm:$0xff]
          %v635 = vld [vmem:[#allocation2 + $0x1a] sm:$0xff]
          %v636 = vld [vmem:[#allocation2 + $0x22] sm:$0xff]
          %v637 = vld [vmem:[#allocation2 + $0x32] sm:$0xff]
          %v638 = vld [vmem:[#allocation2 + $0x3a] sm:$0xff]
          %v639 = vld [vmem:[#allocation2 + $0x4a] sm:$0xff]
          %v640 = vld [vmem:[#allocation2 + $0x52] sm:$0xff]
          %v641 = vld [vmem:[#allocation2 + $0x62] sm:$0xff]
          %v642 = vld [vmem:[#allocation2 + $0x6a] sm:$0xff]
          %v643 = vld [vmem:[#allocation2 + $0x7a] sm:$0xff]
          %v644 = vld [vmem:[#allocation2 + $0x82] sm:$0xff]
          %v645 = vld [vmem:[#allocation2 + $0x92] sm:$0xff]
          %v646 = vld [vmem:[#allocation2 + $0x9a] sm:$0xff]
          %v647 = vld [vmem:[#allocation2 + $0xaa] sm:$0xff]
          %v648 = vld [vmem:[#allocation2 + $0xb2] sm:$0xff]
          %v649 = vld [vmem:[#allocation2 + $0xc2] sm:$0xff]
          %v650 = vld [vmem:[#allocation2 + $0xca] sm:$0xff]
          %v651 = vld [vmem:[#allocation2 + $0xda] sm:$0xff]
          %v652 = vld [vmem:[#allocation2 + $0xe2] sm:$0xff]
          %v653 = vld [vmem:[#allocation2 + $0xf2] sm:$0xff]
          %v654 = vld [vmem:[#allocation2 + $0xfa] sm:$0xff]
          %v655 = vld [vmem:[#allocation2 + $0x10a] sm:$0xff]
          %v656 = vld [vmem:[#allocation2 + $0x112] sm:$0xff]
          %v657 = vld [vmem:[#allocation2 + $0x122] sm:$0xff]
          %v658 = vld [vmem:[#allocation2 + $0x12a] sm:$0xff]
          %v659 = vld [vmem:[#allocation2 + $0x13a] sm:$0xff]
          %v660 = vld [vmem:[#allocation2 + $0x142] sm:$0xff]
          %v661 = vld [vmem:[#allocation2 + $0x152] sm:$0xff]
          %v662 = vld [vmem:[#allocation2 + $0x15a] sm:$0xff]
          %v663 = vld [vmem:[#allocation2 + $0x16a] sm:$0xff]
          %v664 = vld [vmem:[#allocation2 + $0x172] sm:$0xff]
          %v665 = vlaneseq
          %v666 = vshrl.u32 %v665, 7
          %v667 = vsub.s32 0, %v666
          %v668 = vrot.slane %v632, %v667
          %v669 = vmul.f32 %v633, %v668
          %v670 = vmul.f32 %v634, %v668
          %v671 = vmul.f32 %v635, %v668
          %v672 = vmul.f32 %v636, %v668
          %v673 = vmul.f32 %v637, %v668
          %v674 = vmul.f32 %v638, %v668
          %v675 = vmul.f32 %v639, %v668
          %v676 = vmul.f32 %v640, %v668
          %v677 = vmul.f32 %v641, %v668
          %v678 = vmul.f32 %v642, %v668
          %v679 = vmul.f32 %v643, %v668
          %v680 = vmul.f32 %v644, %v668
          %v681 = vmul.f32 %v645, %v668
          %v682 = vmul.f32 %v646, %v668
          %v683 = vmul.f32 %v647, %v668
          %v684 = vmul.f32 %v648, %v668
          %v685 = vmul.f32 %v649, %v668
          %v686 = vmul.f32 %v650, %v668
          %v687 = vmul.f32 %v651, %v668
          %v688 = vmul.f32 %v652, %v668
          %v689 = vmul.f32 %v653, %v668
          %v690 = vmul.f32 %v654, %v668
          %v691 = vmul.f32 %v655, %v668
          %v692 = vmul.f32 %v656, %v668
          %v693 = vmul.f32 %v657, %v668
          %v694 = vmul.f32 %v658, %v668
          %v695 = vmul.f32 %v659, %v668
          %v696 = vmul.f32 %v660, %v668
          %v697 = vmul.f32 %v661, %v668
          %v698 = vmul.f32 %v662, %v668
          %v699 = vmul.f32 %v663, %v668
          %v700 = vmul.f32 %v664, %v668
          %v701 = vadd.f32 %v600, %v669
          %v702 = vadd.f32 %v601, %v670
          %v703 = vadd.f32 %v602, %v671
          %v704 = vadd.f32 %v603, %v672
          %v705 = vadd.f32 %v604, %v673
          %v706 = vadd.f32 %v605, %v674
          %v707 = vadd.f32 %v606, %v675
          %v708 = vadd.f32 %v607, %v676
          %v709 = vadd.f32 %v608, %v677
          %v710 = vadd.f32 %v609, %v678
          %v711 = vadd.f32 %v610, %v679
          %v712 = vadd.f32 %v611, %v680
          %v713 = vadd.f32 %v612, %v681
          %v714 = vadd.f32 %v613, %v682
          %v715 = vadd.f32 %v614, %v683
          %v716 = vadd.f32 %v615, %v684
          %v717 = vadd.f32 %v616, %v685
          %v718 = vadd.f32 %v617, %v686
          %v719 = vadd.f32 %v618, %v687
          %v720 = vadd.f32 %v619, %v688
          %v721 = vadd.f32 %v620, %v689
          %v722 = vadd.f32 %v621, %v690
          %v723 = vadd.f32 %v622, %v691
          %v724 = vadd.f32 %v623, %v692
          %v725 = vadd.f32 %v624, %v693
          %v726 = vadd.f32 %v625, %v694
          %v727 = vadd.f32 %v626, %v695
          %v728 = vadd.f32 %v627, %v696
          %v729 = vadd.f32 %v628, %v697
          %v730 = vadd.f32 %v629, %v698
          %v731 = vadd.f32 %v630, %v699
          %v732 = vadd.f32 %v631, %v700
          %v733 = vld [vmem:[%s1 + $0x3] sm:$0x1]
          %v734 = vld [vmem:[%s429] sm:$0xff]
          %v735 = vld [vmem:[%s429 + $0x8] sm:$0xff]
          %v736 = vld [vmem:[%s429 + $0x18] sm:$0xff]
          %v737 = vld [vmem:[%s429 + $0x20] sm:$0xff]
          %v738 = vld [vmem:[%s429 + $0x30] sm:$0xff]
          %v739 = vld [vmem:[%s429 + $0x38] sm:$0xff]
          %v740 = vld [vmem:[%s429 + $0x48] sm:$0xff]
          %v741 = vld [vmem:[%s429 + $0x50] sm:$0xff]
          %v742 = vld [vmem:[%s429 + $0x60] sm:$0xff]
          %v743 = vld [vmem:[%s429 + $0x68] sm:$0xff]
          %v744 = vld [vmem:[%s429 + $0x78] sm:$0xff]
          %v745 = vld [vmem:[%s429 + $0x80] sm:$0xff]
          %v746 = vld [vmem:[%s429 + $0x90] sm:$0xff]
          %v747 = vld [vmem:[%s429 + $0x98] sm:$0xff]
          %v748 = vld [vmem:[%s429 + $0xa8] sm:$0xff]
          %v749 = vld [vmem:[%s429 + $0xb0] sm:$0xff]
          %v750 = vld [vmem:[%s429 + $0xc0] sm:$0xff]
          %v751 = vld [vmem:[%s429 + $0xc8] sm:$0xff]
          %v752 = vld [vmem:[%s429 + $0xd8] sm:$0xff]
          %v753 = vld [vmem:[%s429 + $0xe0] sm:$0xff]
          %v754 = vld [vmem:[%s429 + $0xf0] sm:$0xff]
          %v755 = vld [vmem:[%s429 + $0xf8] sm:$0xff]
          %v756 = vld [vmem:[%s429 + $0x108] sm:$0xff]
          %v757 = vld [vmem:[%s429 + $0x110] sm:$0xff]
          %v758 = vld [vmem:[%s429 + $0x120] sm:$0xff]
          %v759 = vld [vmem:[%s429 + $0x128] sm:$0xff]
          %v760 = vld [vmem:[%s429 + $0x138] sm:$0xff]
          %v761 = vld [vmem:[%s429 + $0x140] sm:$0xff]
          %v762 = vld [vmem:[%s429 + $0x150] sm:$0xff]
          %v763 = vld [vmem:[%s429 + $0x158] sm:$0xff]
          %v764 = vld [vmem:[%s429 + $0x168] sm:$0xff]
          %v765 = vld [vmem:[%s429 + $0x170] sm:$0xff]
          %v766 = vlaneseq
          %v767 = vshrl.u32 %v766, 7
          %v768 = vsub.s32 0, %v767
          %v769 = vrot.slane %v733, %v768
          %v770 = vmul.f32 %v734, %v769
          %v771 = vmul.f32 %v735, %v769
          %v772 = vmul.f32 %v736, %v769
          %v773 = vmul.f32 %v737, %v769
          %v774 = vmul.f32 %v738, %v769
          %v775 = vmul.f32 %v739, %v769
          %v776 = vmul.f32 %v740, %v769
          %v777 = vmul.f32 %v741, %v769
          %v778 = vmul.f32 %v742, %v769
          %v779 = vmul.f32 %v743, %v769
          %v780 = vmul.f32 %v744, %v769
          %v781 = vmul.f32 %v745, %v769
          %v782 = vmul.f32 %v746, %v769
          %v783 = vmul.f32 %v747, %v769
          %v784 = vmul.f32 %v748, %v769
          %v785 = vmul.f32 %v749, %v769
          %v786 = vmul.f32 %v750, %v769
          %v787 = vmul.f32 %v751, %v769
          %v788 = vmul.f32 %v752, %v769
          %v789 = vmul.f32 %v753, %v769
          %v790 = vmul.f32 %v754, %v769
          %v791 = vmul.f32 %v755, %v769
          %v792 = vmul.f32 %v756, %v769
          %v793 = vmul.f32 %v757, %v769
          %v794 = vmul.f32 %v758, %v769
          %v795 = vmul.f32 %v759, %v769
          %v796 = vmul.f32 %v760, %v769
          %v797 = vmul.f32 %v761, %v769
          %v798 = vmul.f32 %v762, %v769
          %v799 = vmul.f32 %v763, %v769
          %v800 = vmul.f32 %v764, %v769
          %v801 = vmul.f32 %v765, %v769
          %v802 = vadd.f32 %v701, %v770
          %v803 = vadd.f32 %v702, %v771
          %v804 = vadd.f32 %v703, %v772
          %v805 = vadd.f32 %v704, %v773
          %v806 = vadd.f32 %v705, %v774
          %v807 = vadd.f32 %v706, %v775
          %v808 = vadd.f32 %v707, %v776
          %v809 = vadd.f32 %v708, %v777
          %v810 = vadd.f32 %v709, %v778
          %v811 = vadd.f32 %v710, %v779
          %v812 = vadd.f32 %v711, %v780
          %v813 = vadd.f32 %v712, %v781
          %v814 = vadd.f32 %v713, %v782
          %v815 = vadd.f32 %v714, %v783
          %v816 = vadd.f32 %v715, %v784
          %v817 = vadd.f32 %v716, %v785
          %v818 = vadd.f32 %v717, %v786
          %v819 = vadd.f32 %v718, %v787
          %v820 = vadd.f32 %v719, %v788
          %v821 = vadd.f32 %v720, %v789
          %v822 = vadd.f32 %v721, %v790
          %v823 = vadd.f32 %v722, %v791
          %v824 = vadd.f32 %v723, %v792
          %v825 = vadd.f32 %v724, %v793
          %v826 = vadd.f32 %v725, %v794
          %v827 = vadd.f32 %v726, %v795
          %v828 = vadd.f32 %v727, %v796
          %v829 = vadd.f32 %v728, %v797
          %v830 = vadd.f32 %v729, %v798
          %v831 = vadd.f32 %v730, %v799
          %v832 = vadd.f32 %v731, %v800
          %v833 = vadd.f32 %v732, %v801
          %v834 = vld [vmem:[%s1 + $0x4] sm:$0x1]
          %v835 = vld [vmem:[%s429 + $0x1] sm:$0xff]
          %v836 = vld [vmem:[%s429 + $0x9] sm:$0xff]
          %v837 = vld [vmem:[%s429 + $0x19] sm:$0xff]
          %v838 = vld [vmem:[%s429 + $0x21] sm:$0xff]
          %v839 = vld [vmem:[%s429 + $0x31] sm:$0xff]
          %v840 = vld [vmem:[%s429 + $0x39] sm:$0xff]
          %v841 = vld [vmem:[%s429 + $0x49] sm:$0xff]
          %v842 = vld [vmem:[%s429 + $0x51] sm:$0xff]
          %v843 = vld [vmem:[%s429 + $0x61] sm:$0xff]
          %v844 = vld [vmem:[%s429 + $0x69] sm:$0xff]
          %v845 = vld [vmem:[%s429 + $0x79] sm:$0xff]
          %v846 = vld [vmem:[%s429 + $0x81] sm:$0xff]
          %v847 = vld [vmem:[%s429 + $0x91] sm:$0xff]
          %v848 = vld [vmem:[%s429 + $0x99] sm:$0xff]
          %v849 = vld [vmem:[%s429 + $0xa9] sm:$0xff]
          %v850 = vld [vmem:[%s429 + $0xb1] sm:$0xff]
          %v851 = vld [vmem:[%s429 + $0xc1] sm:$0xff]
          %v852 = vld [vmem:[%s429 + $0xc9] sm:$0xff]
          %v853 = vld [vmem:[%s429 + $0xd9] sm:$0xff]
          %v854 = vld [vmem:[%s429 + $0xe1] sm:$0xff]
          %v855 = vld [vmem:[%s429 + $0xf1] sm:$0xff]
          %v856 = vld [vmem:[%s429 + $0xf9] sm:$0xff]
          %v857 = vld [vmem:[%s429 + $0x109] sm:$0xff]
          %v858 = vld [vmem:[%s429 + $0x111] sm:$0xff]
          %v859 = vld [vmem:[%s429 + $0x121] sm:$0xff]
          %v860 = vld [vmem:[%s429 + $0x129] sm:$0xff]
          %v861 = vld [vmem:[%s429 + $0x139] sm:$0xff]
          %v862 = vld [vmem:[%s429 + $0x141] sm:$0xff]
          %v863 = vld [vmem:[%s429 + $0x151] sm:$0xff]
          %v864 = vld [vmem:[%s429 + $0x159] sm:$0xff]
          %v865 = vld [vmem:[%s429 + $0x169] sm:$0xff]
          %v866 = vld [vmem:[%s429 + $0x171] sm:$0xff]
          %v867 = vlaneseq
          %v868 = vshrl.u32 %v867, 7
          %v869 = vsub.s32 0, %v868
          %v870 = vrot.slane %v834, %v869
          %v871 = vmul.f32 %v835, %v870
          %v872 = vmul.f32 %v836, %v870
          %v873 = vmul.f32 %v837, %v870
          %v874 = vmul.f32 %v838, %v870
          %v875 = vmul.f32 %v839, %v870
          %v876 = vmul.f32 %v840, %v870
          %v877 = vmul.f32 %v841, %v870
          %v878 = vmul.f32 %v842, %v870
          %v879 = vmul.f32 %v843, %v870
          %v880 = vmul.f32 %v844, %v870
          %v881 = vmul.f32 %v845, %v870
          %v882 = vmul.f32 %v846, %v870
          %v883 = vmul.f32 %v847, %v870
          %v884 = vmul.f32 %v848, %v870
          %v885 = vmul.f32 %v849, %v870
          %v886 = vmul.f32 %v850, %v870
          %v887 = vmul.f32 %v851, %v870
          %v888 = vmul.f32 %v852, %v870
          %v889 = vmul.f32 %v853, %v870
          %v890 = vmul.f32 %v854, %v870
          %v891 = vmul.f32 %v855, %v870
          %v892 = vmul.f32 %v856, %v870
          %v893 = vmul.f32 %v857, %v870
          %v894 = vmul.f32 %v858, %v870
          %v895 = vmul.f32 %v859, %v870
          %v896 = vmul.f32 %v860, %v870
          %v897 = vmul.f32 %v861, %v870
          %v898 = vmul.f32 %v862, %v870
          %v899 = vmul.f32 %v863, %v870
          %v900 = vmul.f32 %v864, %v870
          %v901 = vmul.f32 %v865, %v870
          %v902 = vmul.f32 %v866, %v870
          %v903 = vadd.f32 %v802, %v871
          %v904 = vadd.f32 %v803, %v872
          %v905 = vadd.f32 %v804, %v873
          %v906 = vadd.f32 %v805, %v874
          %v907 = vadd.f32 %v806, %v875
          %v908 = vadd.f32 %v807, %v876
          %v909 = vadd.f32 %v808, %v877
          %v910 = vadd.f32 %v809, %v878
          %v911 = vadd.f32 %v810, %v879
          %v912 = vadd.f32 %v811, %v880
          %v913 = vadd.f32 %v812, %v881
          %v914 = vadd.f32 %v813, %v882
          %v915 = vadd.f32 %v814, %v883
          %v916 = vadd.f32 %v815, %v884
          %v917 = vadd.f32 %v816, %v885
          %v918 = vadd.f32 %v817, %v886
          %v919 = vadd.f32 %v818, %v887
          %v920 = vadd.f32 %v819, %v888
          %v921 = vadd.f32 %v820, %v889
          %v922 = vadd.f32 %v821, %v890
          %v923 = vadd.f32 %v822, %v891
          %v924 = vadd.f32 %v823, %v892
          %v925 = vadd.f32 %v824, %v893
          %v926 = vadd.f32 %v825, %v894
          %v927 = vadd.f32 %v826, %v895
          %v928 = vadd.f32 %v827, %v896
          %v929 = vadd.f32 %v828, %v897
          %v930 = vadd.f32 %v829, %v898
          %v931 = vadd.f32 %v830, %v899
          %v932 = vadd.f32 %v831, %v900
          %v933 = vadd.f32 %v832, %v901
          %v934 = vadd.f32 %v833, %v902
          %v935 = vld [vmem:[%s1 + $0x5] sm:$0x1]
          %v936 = vld [vmem:[%s429 + $0x2] sm:$0xff]
          %v937 = vld [vmem:[%s429 + $0xa] sm:$0xff]
          %v938 = vld [vmem:[%s429 + $0x1a] sm:$0xff]
          %v939 = vld [vmem:[%s429 + $0x22] sm:$0xff]
          %v940 = vld [vmem:[%s429 + $0x32] sm:$0xff]
          %v941 = vld [vmem:[%s429 + $0x3a] sm:$0xff]
          %v942 = vld [vmem:[%s429 + $0x4a] sm:$0xff]
          %v943 = vld [vmem:[%s429 + $0x52] sm:$0xff]
          %v944 = vld [vmem:[%s429 + $0x62] sm:$0xff]
          %v945 = vld [vmem:[%s429 + $0x6a] sm:$0xff]
          %v946 = vld [vmem:[%s429 + $0x7a] sm:$0xff]
          %v947 = vld [vmem:[%s429 + $0x82] sm:$0xff]
          %v948 = vld [vmem:[%s429 + $0x92] sm:$0xff]
          %v949 = vld [vmem:[%s429 + $0x9a] sm:$0xff]
          %v950 = vld [vmem:[%s429 + $0xaa] sm:$0xff]
          %v951 = vld [vmem:[%s429 + $0xb2] sm:$0xff]
          %v952 = vld [vmem:[%s429 + $0xc2] sm:$0xff]
          %v953 = vld [vmem:[%s429 + $0xca] sm:$0xff]
          %v954 = vld [vmem:[%s429 + $0xda] sm:$0xff]
          %v955 = vld [vmem:[%s429 + $0xe2] sm:$0xff]
          %v956 = vld [vmem:[%s429 + $0xf2] sm:$0xff]
          %v957 = vld [vmem:[%s429 + $0xfa] sm:$0xff]
          %v958 = vld [vmem:[%s429 + $0x10a] sm:$0xff]
          %v959 = vld [vmem:[%s429 + $0x112] sm:$0xff]
          %v960 = vld [vmem:[%s429 + $0x122] sm:$0xff]
          %v961 = vld [vmem:[%s429 + $0x12a] sm:$0xff]
          %v962 = vld [vmem:[%s429 + $0x13a] sm:$0xff]
          %v963 = vld [vmem:[%s429 + $0x142] sm:$0xff]
          %v964 = vld [vmem:[%s429 + $0x152] sm:$0xff]
          %v965 = vld [vmem:[%s429 + $0x15a] sm:$0xff]
          %v966 = vld [vmem:[%s429 + $0x16a] sm:$0xff]
          %v967 = vld [vmem:[%s429 + $0x172] sm:$0xff]
          %v968 = vlaneseq
          %v969 = vshrl.u32 %v968, 7
          %v970 = vsub.s32 0, %v969
          %v971 = vrot.slane %v935, %v970
          %v972 = vmul.f32 %v936, %v971
          %v973 = vmul.f32 %v937, %v971
          %v974 = vmul.f32 %v938, %v971
          %v975 = vmul.f32 %v939, %v971
          %v976 = vmul.f32 %v940, %v971
          %v977 = vmul.f32 %v941, %v971
          %v978 = vmul.f32 %v942, %v971
          %v979 = vmul.f32 %v943, %v971
          %v980 = vmul.f32 %v944, %v971
          %v981 = vmul.f32 %v945, %v971
          %v982 = vmul.f32 %v946, %v971
          %v983 = vmul.f32 %v947, %v971
          %v984 = vmul.f32 %v948, %v971
          %v985 = vmul.f32 %v949, %v971
          %v986 = vmul.f32 %v950, %v971
          %v987 = vmul.f32 %v951, %v971
          %v988 = vmul.f32 %v952, %v971
          %v989 = vmul.f32 %v953, %v971
          %v990 = vmul.f32 %v954, %v971
          %v991 = vmul.f32 %v955, %v971
          %v992 = vmul.f32 %v956, %v971
          %v993 = vmul.f32 %v957, %v971
          %v994 = vmul.f32 %v958, %v971
          %v995 = vmul.f32 %v959, %v971
          %v996 = vmul.f32 %v960, %v971
          %v997 = vmul.f32 %v961, %v971
          %v998 = vmul.f32 %v962, %v971
          %v999 = vmul.f32 %v963, %v971
          %v1000 = vmul.f32 %v964, %v971
          %v1001 = vmul.f32 %v965, %v971
          %v1002 = vmul.f32 %v966, %v971
          %v1003 = vmul.f32 %v967, %v971
          %v1004 = vadd.f32 %v903, %v972
          %v1005 = vadd.f32 %v904, %v973
          %v1006 = vadd.f32 %v905, %v974
          %v1007 = vadd.f32 %v906, %v975
          %v1008 = vadd.f32 %v907, %v976
          %v1009 = vadd.f32 %v908, %v977
          %v1010 = vadd.f32 %v909, %v978
          %v1011 = vadd.f32 %v910, %v979
          %v1012 = vadd.f32 %v911, %v980
          %v1013 = vadd.f32 %v912, %v981
          %v1014 = vadd.f32 %v913, %v982
          %v1015 = vadd.f32 %v914, %v983
          %v1016 = vadd.f32 %v915, %v984
          %v1017 = vadd.f32 %v916, %v985
          %v1018 = vadd.f32 %v917, %v986
          %v1019 = vadd.f32 %v918, %v987
          %v1020 = vadd.f32 %v919, %v988
          %v1021 = vadd.f32 %v920, %v989
          %v1022 = vadd.f32 %v921, %v990
          %v1023 = vadd.f32 %v922, %v991
          %v1024 = vadd.f32 %v923, %v992
          %v1025 = vadd.f32 %v924, %v993
          %v1026 = vadd.f32 %v925, %v994
          %v1027 = vadd.f32 %v926, %v995
          %v1028 = vadd.f32 %v927, %v996
          %v1029 = vadd.f32 %v928, %v997
          %v1030 = vadd.f32 %v929, %v998
          %v1031 = vadd.f32 %v930, %v999
          %v1032 = vadd.f32 %v931, %v1000
          %v1033 = vadd.f32 %v932, %v1001
          %v1034 = vadd.f32 %v933, %v1002
          %v1035 = vadd.f32 %v934, %v1003
          %v1036 = vld [vmem:[%s1 + $0x6] sm:$0x1]
          %s1037 = scalar_lea.vmem [#allocation2], 48
          %v1038 = vld [vmem:[%s1037] sm:$0xff]
          %v1039 = vld [vmem:[%s1037 + $0x8] sm:$0xff]
          %v1040 = vld [vmem:[%s1037 + $0x18] sm:$0xff]
          %v1041 = vld [vmem:[%s1037 + $0x20] sm:$0xff]
          %v1042 = vld [vmem:[%s1037 + $0x30] sm:$0xff]
          %v1043 = vld [vmem:[%s1037 + $0x38] sm:$0xff]
          %v1044 = vld [vmem:[%s1037 + $0x48] sm:$0xff]
          %v1045 = vld [vmem:[%s1037 + $0x50] sm:$0xff]
          %v1046 = vld [vmem:[%s1037 + $0x60] sm:$0xff]
          %v1047 = vld [vmem:[%s1037 + $0x68] sm:$0xff]
          %v1048 = vld [vmem:[%s1037 + $0x78] sm:$0xff]
          %v1049 = vld [vmem:[%s1037 + $0x80] sm:$0xff]
          %v1050 = vld [vmem:[%s1037 + $0x90] sm:$0xff]
          %v1051 = vld [vmem:[%s1037 + $0x98] sm:$0xff]
          %v1052 = vld [vmem:[%s1037 + $0xa8] sm:$0xff]
          %v1053 = vld [vmem:[%s1037 + $0xb0] sm:$0xff]
          %v1054 = vld [vmem:[%s1037 + $0xc0] sm:$0xff]
          %v1055 = vld [vmem:[%s1037 + $0xc8] sm:$0xff]
          %v1056 = vld [vmem:[%s1037 + $0xd8] sm:$0xff]
          %v1057 = vld [vmem:[%s1037 + $0xe0] sm:$0xff]
          %v1058 = vld [vmem:[%s1037 + $0xf0] sm:$0xff]
          %v1059 = vld [vmem:[%s1037 + $0xf8] sm:$0xff]
          %v1060 = vld [vmem:[%s1037 + $0x108] sm:$0xff]
          %v1061 = vld [vmem:[%s1037 + $0x110] sm:$0xff]
          %v1062 = vld [vmem:[%s1037 + $0x120] sm:$0xff]
          %v1063 = vld [vmem:[%s1037 + $0x128] sm:$0xff]
          %v1064 = vld [vmem:[%s1037 + $0x138] sm:$0xff]
          %v1065 = vld [vmem:[%s1037 + $0x140] sm:$0xff]
          %v1066 = vld [vmem:[%s1037 + $0x150] sm:$0xff]
          %v1067 = vld [vmem:[%s1037 + $0x158] sm:$0xff]
          %v1068 = vld [vmem:[%s1037 + $0x168] sm:$0xff]
          %v1069 = vld [vmem:[%s1037 + $0x170] sm:$0xff]
          %v1070 = vlaneseq
          %v1071 = vshrl.u32 %v1070, 7
          %v1072 = vsub.s32 0, %v1071
          %v1073 = vrot.slane %v1036, %v1072
          %v1074 = vmul.f32 %v1038, %v1073
          %v1075 = vmul.f32 %v1039, %v1073
          %v1076 = vmul.f32 %v1040, %v1073
          %v1077 = vmul.f32 %v1041, %v1073
          %v1078 = vmul.f32 %v1042, %v1073
          %v1079 = vmul.f32 %v1043, %v1073
          %v1080 = vmul.f32 %v1044, %v1073
          %v1081 = vmul.f32 %v1045, %v1073
          %v1082 = vmul.f32 %v1046, %v1073
          %v1083 = vmul.f32 %v1047, %v1073
          %v1084 = vmul.f32 %v1048, %v1073
          %v1085 = vmul.f32 %v1049, %v1073
          %v1086 = vmul.f32 %v1050, %v1073
          %v1087 = vmul.f32 %v1051, %v1073
          %v1088 = vmul.f32 %v1052, %v1073
          %v1089 = vmul.f32 %v1053, %v1073
          %v1090 = vmul.f32 %v1054, %v1073
          %v1091 = vmul.f32 %v1055, %v1073
          %v1092 = vmul.f32 %v1056, %v1073
          %v1093 = vmul.f32 %v1057, %v1073
          %v1094 = vmul.f32 %v1058, %v1073
          %v1095 = vmul.f32 %v1059, %v1073
          %v1096 = vmul.f32 %v1060, %v1073
          %v1097 = vmul.f32 %v1061, %v1073
          %v1098 = vmul.f32 %v1062, %v1073
          %v1099 = vmul.f32 %v1063, %v1073
          %v1100 = vmul.f32 %v1064, %v1073
          %v1101 = vmul.f32 %v1065, %v1073
          %v1102 = vmul.f32 %v1066, %v1073
          %v1103 = vmul.f32 %v1067, %v1073
          %v1104 = vmul.f32 %v1068, %v1073
          %v1105 = vmul.f32 %v1069, %v1073
          %v1106 = vadd.f32 %v1004, %v1074
          %v1107 = vadd.f32 %v1005, %v1075
          %v1108 = vadd.f32 %v1006, %v1076
          %v1109 = vadd.f32 %v1007, %v1077
          %v1110 = vadd.f32 %v1008, %v1078
          %v1111 = vadd.f32 %v1009, %v1079
          %v1112 = vadd.f32 %v1010, %v1080
          %v1113 = vadd.f32 %v1011, %v1081
          %v1114 = vadd.f32 %v1012, %v1082
          %v1115 = vadd.f32 %v1013, %v1083
          %v1116 = vadd.f32 %v1014, %v1084
          %v1117 = vadd.f32 %v1015, %v1085
          %v1118 = vadd.f32 %v1016, %v1086
          %v1119 = vadd.f32 %v1017, %v1087
          %v1120 = vadd.f32 %v1018, %v1088
          %v1121 = vadd.f32 %v1019, %v1089
          %v1122 = vadd.f32 %v1020, %v1090
          %v1123 = vadd.f32 %v1021, %v1091
          %v1124 = vadd.f32 %v1022, %v1092
          %v1125 = vadd.f32 %v1023, %v1093
          %v1126 = vadd.f32 %v1024, %v1094
          %v1127 = vadd.f32 %v1025, %v1095
          %v1128 = vadd.f32 %v1026, %v1096
          %v1129 = vadd.f32 %v1027, %v1097
          %v1130 = vadd.f32 %v1028, %v1098
          %v1131 = vadd.f32 %v1029, %v1099
          %v1132 = vadd.f32 %v1030, %v1100
          %v1133 = vadd.f32 %v1031, %v1101
          %v1134 = vadd.f32 %v1032, %v1102
          %v1135 = vadd.f32 %v1033, %v1103
          %v1136 = vadd.f32 %v1034, %v1104
          %v1137 = vadd.f32 %v1035, %v1105
          %v1138 = vld [vmem:[%s1 + $0x7] sm:$0x1]
          %v1139 = vld [vmem:[%s1037 + $0x1] sm:$0xff]
          %v1140 = vld [vmem:[%s1037 + $0x9] sm:$0xff]
          %v1141 = vld [vmem:[%s1037 + $0x19] sm:$0xff]
          %v1142 = vld [vmem:[%s1037 + $0x21] sm:$0xff]
          %v1143 = vld [vmem:[%s1037 + $0x31] sm:$0xff]
          %v1144 = vld [vmem:[%s1037 + $0x39] sm:$0xff]
          %v1145 = vld [vmem:[%s1037 + $0x49] sm:$0xff]
          %v1146 = vld [vmem:[%s1037 + $0x51] sm:$0xff]
          %v1147 = vld [vmem:[%s1037 + $0x61] sm:$0xff]
          %v1148 = vld [vmem:[%s1037 + $0x69] sm:$0xff]
          %v1149 = vld [vmem:[%s1037 + $0x79] sm:$0xff]
          %v1150 = vld [vmem:[%s1037 + $0x81] sm:$0xff]
          %v1151 = vld [vmem:[%s1037 + $0x91] sm:$0xff]
          %v1152 = vld [vmem:[%s1037 + $0x99] sm:$0xff]
          %v1153 = vld [vmem:[%s1037 + $0xa9] sm:$0xff]
          %v1154 = vld [vmem:[%s1037 + $0xb1] sm:$0xff]
          %v1155 = vld [vmem:[%s1037 + $0xc1] sm:$0xff]
          %v1156 = vld [vmem:[%s1037 + $0xc9] sm:$0xff]
          %v1157 = vld [vmem:[%s1037 + $0xd9] sm:$0xff]
          %v1158 = vld [vmem:[%s1037 + $0xe1] sm:$0xff]
          %v1159 = vld [vmem:[%s1037 + $0xf1] sm:$0xff]
          %v1160 = vld [vmem:[%s1037 + $0xf9] sm:$0xff]
          %v1161 = vld [vmem:[%s1037 + $0x109] sm:$0xff]
          %v1162 = vld [vmem:[%s1037 + $0x111] sm:$0xff]
          %v1163 = vld [vmem:[%s1037 + $0x121] sm:$0xff]
          %v1164 = vld [vmem:[%s1037 + $0x129] sm:$0xff]
          %v1165 = vld [vmem:[%s1037 + $0x139] sm:$0xff]
          %v1166 = vld [vmem:[%s1037 + $0x141] sm:$0xff]
          %v1167 = vld [vmem:[%s1037 + $0x151] sm:$0xff]
          %v1168 = vld [vmem:[%s1037 + $0x159] sm:$0xff]
          %v1169 = vld [vmem:[%s1037 + $0x169] sm:$0xff]
          %v1170 = vld [vmem:[%s1037 + $0x171] sm:$0xff]
          %v1171 = vlaneseq
          %v1172 = vshrl.u32 %v1171, 7
          %v1173 = vsub.s32 0, %v1172
          %v1174 = vrot.slane %v1138, %v1173
          %v1175 = vmul.f32 %v1139, %v1174
          %v1176 = vmul.f32 %v1140, %v1174
          %v1177 = vmul.f32 %v1141, %v1174
          %v1178 = vmul.f32 %v1142, %v1174
          %v1179 = vmul.f32 %v1143, %v1174
          %v1180 = vmul.f32 %v1144, %v1174
          %v1181 = vmul.f32 %v1145, %v1174
          %v1182 = vmul.f32 %v1146, %v1174
          %v1183 = vmul.f32 %v1147, %v1174
          %v1184 = vmul.f32 %v1148, %v1174
          %v1185 = vmul.f32 %v1149, %v1174
          %v1186 = vmul.f32 %v1150, %v1174
          %v1187 = vmul.f32 %v1151, %v1174
          %v1188 = vmul.f32 %v1152, %v1174
          %v1189 = vmul.f32 %v1153, %v1174
          %v1190 = vmul.f32 %v1154, %v1174
          %v1191 = vmul.f32 %v1155, %v1174
          %v1192 = vmul.f32 %v1156, %v1174
          %v1193 = vmul.f32 %v1157, %v1174
          %v1194 = vmul.f32 %v1158, %v1174
          %v1195 = vmul.f32 %v1159, %v1174
          %v1196 = vmul.f32 %v1160, %v1174
          %v1197 = vmul.f32 %v1161, %v1174
          %v1198 = vmul.f32 %v1162, %v1174
          %v1199 = vmul.f32 %v1163, %v1174
          %v1200 = vmul.f32 %v1164, %v1174
          %v1201 = vmul.f32 %v1165, %v1174
          %v1202 = vmul.f32 %v1166, %v1174
          %v1203 = vmul.f32 %v1167, %v1174
          %v1204 = vmul.f32 %v1168, %v1174
          %v1205 = vmul.f32 %v1169, %v1174
          %v1206 = vmul.f32 %v1170, %v1174
          %v1207 = vadd.f32 %v1106, %v1175
          %v1208 = vadd.f32 %v1107, %v1176
          %v1209 = vadd.f32 %v1108, %v1177
          %v1210 = vadd.f32 %v1109, %v1178
          %v1211 = vadd.f32 %v1110, %v1179
          %v1212 = vadd.f32 %v1111, %v1180
          %v1213 = vadd.f32 %v1112, %v1181
          %v1214 = vadd.f32 %v1113, %v1182
          %v1215 = vadd.f32 %v1114, %v1183
          %v1216 = vadd.f32 %v1115, %v1184
          %v1217 = vadd.f32 %v1116, %v1185
          %v1218 = vadd.f32 %v1117, %v1186
          %v1219 = vadd.f32 %v1118, %v1187
          %v1220 = vadd.f32 %v1119, %v1188
          %v1221 = vadd.f32 %v1120, %v1189
          %v1222 = vadd.f32 %v1121, %v1190
          %v1223 = vadd.f32 %v1122, %v1191
          %v1224 = vadd.f32 %v1123, %v1192
          %v1225 = vadd.f32 %v1124, %v1193
          %v1226 = vadd.f32 %v1125, %v1194
          %v1227 = vadd.f32 %v1126, %v1195
          %v1228 = vadd.f32 %v1127, %v1196
          %v1229 = vadd.f32 %v1128, %v1197
          %v1230 = vadd.f32 %v1129, %v1198
          %v1231 = vadd.f32 %v1130, %v1199
          %v1232 = vadd.f32 %v1131, %v1200
          %v1233 = vadd.f32 %v1132, %v1201
          %v1234 = vadd.f32 %v1133, %v1202
          %v1235 = vadd.f32 %v1134, %v1203
          %v1236 = vadd.f32 %v1135, %v1204
          %v1237 = vadd.f32 %v1136, %v1205
          %v1238 = vadd.f32 %v1137, %v1206
          %v1239 = vld [vmem:[%s1 + $0x8] sm:$0x1]
          %v1240 = vld [vmem:[%s1037 + $0x2] sm:$0xff]
          %v1241 = vld [vmem:[%s1037 + $0xa] sm:$0xff]
          %v1242 = vld [vmem:[%s1037 + $0x1a] sm:$0xff]
          %v1243 = vld [vmem:[%s1037 + $0x22] sm:$0xff]
          %v1244 = vld [vmem:[%s1037 + $0x32] sm:$0xff]
          %v1245 = vld [vmem:[%s1037 + $0x3a] sm:$0xff]
          %v1246 = vld [vmem:[%s1037 + $0x4a] sm:$0xff]
          %v1247 = vld [vmem:[%s1037 + $0x52] sm:$0xff]
          %v1248 = vld [vmem:[%s1037 + $0x62] sm:$0xff]
          %v1249 = vld [vmem:[%s1037 + $0x6a] sm:$0xff]
          %v1250 = vld [vmem:[%s1037 + $0x7a] sm:$0xff]
          %v1251 = vld [vmem:[%s1037 + $0x82] sm:$0xff]
          %v1252 = vld [vmem:[%s1037 + $0x92] sm:$0xff]
          %v1253 = vld [vmem:[%s1037 + $0x9a] sm:$0xff]
          %v1254 = vld [vmem:[%s1037 + $0xaa] sm:$0xff]
          %v1255 = vld [vmem:[%s1037 + $0xb2] sm:$0xff]
          %v1256 = vld [vmem:[%s1037 + $0xc2] sm:$0xff]
          %v1257 = vld [vmem:[%s1037 + $0xca] sm:$0xff]
          %v1258 = vld [vmem:[%s1037 + $0xda] sm:$0xff]
          %v1259 = vld [vmem:[%s1037 + $0xe2] sm:$0xff]
          %v1260 = vld [vmem:[%s1037 + $0xf2] sm:$0xff]
          %v1261 = vld [vmem:[%s1037 + $0xfa] sm:$0xff]
          %v1262 = vld [vmem:[%s1037 + $0x10a] sm:$0xff]
          %v1263 = vld [vmem:[%s1037 + $0x112] sm:$0xff]
          %v1264 = vld [vmem:[%s1037 + $0x122] sm:$0xff]
          %v1265 = vld [vmem:[%s1037 + $0x12a] sm:$0xff]
          %v1266 = vld [vmem:[%s1037 + $0x13a] sm:$0xff]
          %v1267 = vld [vmem:[%s1037 + $0x142] sm:$0xff]
          %v1268 = vld [vmem:[%s1037 + $0x152] sm:$0xff]
          %v1269 = vld [vmem:[%s1037 + $0x15a] sm:$0xff]
          %v1270 = vld [vmem:[%s1037 + $0x16a] sm:$0xff]
          %v1271 = vld [vmem:[%s1037 + $0x172] sm:$0xff]
          %v1272 = vlaneseq
          %v1273 = vshrl.u32 %v1272, 7
          %v1274 = vsub.s32 0, %v1273
          %v1275 = vrot.slane %v1239, %v1274
          %v1276 = vmul.f32 %v1240, %v1275
          %v1277 = vmul.f32 %v1241, %v1275
          %v1278 = vmul.f32 %v1242, %v1275
          %v1279 = vmul.f32 %v1243, %v1275
          %v1280 = vmul.f32 %v1244, %v1275
          %v1281 = vmul.f32 %v1245, %v1275
          %v1282 = vmul.f32 %v1246, %v1275
          %v1283 = vmul.f32 %v1247, %v1275
          %v1284 = vmul.f32 %v1248, %v1275
          %v1285 = vmul.f32 %v1249, %v1275
          %v1286 = vmul.f32 %v1250, %v1275
          %v1287 = vmul.f32 %v1251, %v1275
          %v1288 = vmul.f32 %v1252, %v1275
          %v1289 = vmul.f32 %v1253, %v1275
          %v1290 = vmul.f32 %v1254, %v1275
          %v1291 = vmul.f32 %v1255, %v1275
          %v1292 = vmul.f32 %v1256, %v1275
          %v1293 = vmul.f32 %v1257, %v1275
          %v1294 = vmul.f32 %v1258, %v1275
          %v1295 = vmul.f32 %v1259, %v1275
          %v1296 = vmul.f32 %v1260, %v1275
          %v1297 = vmul.f32 %v1261, %v1275
          %v1298 = vmul.f32 %v1262, %v1275
          %v1299 = vmul.f32 %v1263, %v1275
          %v1300 = vmul.f32 %v1264, %v1275
          %v1301 = vmul.f32 %v1265, %v1275
          %v1302 = vmul.f32 %v1266, %v1275
          %v1303 = vmul.f32 %v1267, %v1275
          %v1304 = vmul.f32 %v1268, %v1275
          %v1305 = vmul.f32 %v1269, %v1275
          %v1306 = vmul.f32 %v1270, %v1275
          %v1307 = vmul.f32 %v1271, %v1275
          %v1308 = vadd.f32 %v1207, %v1276
          %v1309 = vadd.f32 %v1208, %v1277
          %v1310 = vadd.f32 %v1209, %v1278
          %v1311 = vadd.f32 %v1210, %v1279
          %v1312 = vadd.f32 %v1211, %v1280
          %v1313 = vadd.f32 %v1212, %v1281
          %v1314 = vadd.f32 %v1213, %v1282
          %v1315 = vadd.f32 %v1214, %v1283
          %v1316 = vadd.f32 %v1215, %v1284
          %v1317 = vadd.f32 %v1216, %v1285
          %v1318 = vadd.f32 %v1217, %v1286
          %v1319 = vadd.f32 %v1218, %v1287
          %v1320 = vadd.f32 %v1219, %v1288
          %v1321 = vadd.f32 %v1220, %v1289
          %v1322 = vadd.f32 %v1221, %v1290
          %v1323 = vadd.f32 %v1222, %v1291
          %v1324 = vadd.f32 %v1223, %v1292
          %v1325 = vadd.f32 %v1224, %v1293
          %v1326 = vadd.f32 %v1225, %v1294
          %v1327 = vadd.f32 %v1226, %v1295
          %v1328 = vadd.f32 %v1227, %v1296
          %v1329 = vadd.f32 %v1228, %v1297
          %v1330 = vadd.f32 %v1229, %v1298
          %v1331 = vadd.f32 %v1230, %v1299
          %v1332 = vadd.f32 %v1231, %v1300
          %v1333 = vadd.f32 %v1232, %v1301
          %v1334 = vadd.f32 %v1233, %v1302
          %v1335 = vadd.f32 %v1234, %v1303
          %v1336 = vadd.f32 %v1235, %v1304
          %v1337 = vadd.f32 %v1236, %v1305
          %v1338 = vadd.f32 %v1237, %v1306
          %v1339 = vadd.f32 %v1238, %v1307
          %v1340 = vld [vmem:[%s2] sm:$0x1]
          %v1342 = vlaneseq
          %v1343 = vshrl.u32 %v1342, 7
          %v1344 = vsub.s32 0, %v1343
          %v1345 = vrot.slane %v1340, %v1344
          %v1347 = vmul.f32 %v1308, %v1345
          %v1348 = vmul.f32 %v1309, %v1345
          %v1349 = vmul.f32 %v1310, %v1345
          %v1350 = vmul.f32 %v1311, %v1345
          %v1351 = vmul.f32 %v1312, %v1345
          %v1352 = vmul.f32 %v1313, %v1345
          %v1353 = vmul.f32 %v1314, %v1345
          %v1354 = vmul.f32 %v1315, %v1345
          %v1355 = vmul.f32 %v1316, %v1345
          %v1356 = vmul.f32 %v1317, %v1345
          %v1357 = vmul.f32 %v1318, %v1345
          %v1358 = vmul.f32 %v1319, %v1345
          %v1359 = vmul.f32 %v1320, %v1345
          %v1360 = vmul.f32 %v1321, %v1345
          %v1361 = vmul.f32 %v1322, %v1345
          %v1362 = vmul.f32 %v1323, %v1345
          %v1363 = vmul.f32 %v1324, %v1345
          %v1364 = vmul.f32 %v1325, %v1345
          %v1365 = vmul.f32 %v1326, %v1345
          %v1366 = vmul.f32 %v1327, %v1345
          %v1367 = vmul.f32 %v1328, %v1345
          %v1368 = vmul.f32 %v1329, %v1345
          %v1369 = vmul.f32 %v1330, %v1345
          %v1370 = vmul.f32 %v1331, %v1345
          %v1371 = vmul.f32 %v1332, %v1345
          %v1372 = vmul.f32 %v1333, %v1345
          %v1373 = vmul.f32 %v1334, %v1345
          %v1374 = vmul.f32 %v1335, %v1345
          %v1375 = vmul.f32 %v1336, %v1345
          %v1376 = vmul.f32 %v1337, %v1345
          %v1377 = vmul.f32 %v1338, %v1345
          %v1378 = vmul.f32 %v1339, %v1345
          %v1379 = vld [vmem:[%s3] sm:$0x1]
          %v1381 = vlaneseq
          %v1382 = vshrl.u32 %v1381, 7
          %v1383 = vsub.s32 0, %v1382
          %v1384 = vrot.slane %v1379, %v1383
          %v1386 = vadd.f32 %v1347, %v1384
          %v1387 = vadd.f32 %v1348, %v1384
          %v1388 = vadd.f32 %v1349, %v1384
          %v1389 = vadd.f32 %v1350, %v1384
          %v1390 = vadd.f32 %v1351, %v1384
          %v1391 = vadd.f32 %v1352, %v1384
          %v1392 = vadd.f32 %v1353, %v1384
          %v1393 = vadd.f32 %v1354, %v1384
          %v1394 = vadd.f32 %v1355, %v1384
          %v1395 = vadd.f32 %v1356, %v1384
          %v1396 = vadd.f32 %v1357, %v1384
          %v1397 = vadd.f32 %v1358, %v1384
          %v1398 = vadd.f32 %v1359, %v1384
          %v1399 = vadd.f32 %v1360, %v1384
          %v1400 = vadd.f32 %v1361, %v1384
          %v1401 = vadd.f32 %v1362, %v1384
          %v1402 = vadd.f32 %v1363, %v1384
          %v1403 = vadd.f32 %v1364, %v1384
          %v1404 = vadd.f32 %v1365, %v1384
          %v1405 = vadd.f32 %v1366, %v1384
          %v1406 = vadd.f32 %v1367, %v1384
          %v1407 = vadd.f32 %v1368, %v1384
          %v1408 = vadd.f32 %v1369, %v1384
          %v1409 = vadd.f32 %v1370, %v1384
          %v1410 = vadd.f32 %v1371, %v1384
          %v1411 = vadd.f32 %v1372, %v1384
          %v1412 = vadd.f32 %v1373, %v1384
          %v1413 = vadd.f32 %v1374, %v1384
          %v1414 = vadd.f32 %v1375, %v1384
          %v1415 = vadd.f32 %v1376, %v1384
          %v1416 = vadd.f32 %v1377, %v1384
          %v1417 = vadd.f32 %v1378, %v1384
          %v1418 = vmax.f32 %v1386, 0.0
          %v1419 = vmax.f32 %v1387, 0.0
          %v1420 = vmax.f32 %v1388, 0.0
          %v1421 = vmax.f32 %v1389, 0.0
          %v1422 = vmax.f32 %v1390, 0.0
          %v1423 = vmax.f32 %v1391, 0.0
          %v1424 = vmax.f32 %v1392, 0.0
          %v1425 = vmax.f32 %v1393, 0.0
          %v1426 = vmax.f32 %v1394, 0.0
          %v1427 = vmax.f32 %v1395, 0.0
          %v1428 = vmax.f32 %v1396, 0.0
          %v1429 = vmax.f32 %v1397, 0.0
          %v1430 = vmax.f32 %v1398, 0.0
          %v1431 = vmax.f32 %v1399, 0.0
          %v1432 = vmax.f32 %v1400, 0.0
          %v1433 = vmax.f32 %v1401, 0.0
          %v1434 = vmax.f32 %v1402, 0.0
          %v1435 = vmax.f32 %v1403, 0.0
          %v1436 = vmax.f32 %v1404, 0.0
          %v1437 = vmax.f32 %v1405, 0.0
          %v1438 = vmax.f32 %v1406, 0.0
          %v1439 = vmax.f32 %v1407, 0.0
          %v1440 = vmax.f32 %v1408, 0.0
          %v1441 = vmax.f32 %v1409, 0.0
          %v1442 = vmax.f32 %v1410, 0.0
          %v1443 = vmax.f32 %v1411, 0.0
          %v1444 = vmax.f32 %v1412, 0.0
          %v1445 = vmax.f32 %v1413, 0.0
          %v1446 = vmax.f32 %v1414, 0.0
          %v1447 = vmax.f32 %v1415, 0.0
          %v1448 = vmax.f32 %v1416, 0.0
          %v1449 = vmax.f32 %v1417, 0.0
          %1450 = vst.msk [vmem:[#allocation3] sm:$0xff] %vm341, %v1418
          %1451 = vst.msk [vmem:[#allocation3 + $0x8] sm:$0xff] %vm341, %v1419
          %1452 = vst.msk [vmem:[#allocation3 + $0x10] sm:$0xff] %vm341, %v1420
          %1453 = vst.msk [vmem:[#allocation3 + $0x18] sm:$0xff] %vm341, %v1421
          %1454 = vst.msk [vmem:[#allocation3 + $0x20] sm:$0xff] %vm341, %v1422
          %1455 = vst.msk [vmem:[#allocation3 + $0x28] sm:$0xff] %vm341, %v1423
          %1456 = vst.msk [vmem:[#allocation3 + $0x30] sm:$0xff] %vm341, %v1424
          %1457 = vst.msk [vmem:[#allocation3 + $0x38] sm:$0xff] %vm341, %v1425
          %1458 = vst.msk [vmem:[#allocation3 + $0x40] sm:$0xff] %vm341, %v1426
          %1459 = vst.msk [vmem:[#allocation3 + $0x48] sm:$0xff] %vm341, %v1427
          %1460 = vst.msk [vmem:[#allocation3 + $0x50] sm:$0xff] %vm341, %v1428
          %1461 = vst.msk [vmem:[#allocation3 + $0x58] sm:$0xff] %vm341, %v1429
          %1462 = vst.msk [vmem:[#allocation3 + $0x60] sm:$0xff] %vm341, %v1430
          %1463 = vst.msk [vmem:[#allocation3 + $0x68] sm:$0xff] %vm341, %v1431
          %1464 = vst.msk [vmem:[#allocation3 + $0x70] sm:$0xff] %vm341, %v1432
          %1465 = vst.msk [vmem:[#allocation3 + $0x78] sm:$0xff] %vm341, %v1433
          %1466 = vst.msk [vmem:[#allocation3 + $0x80] sm:$0xff] %vm341, %v1434
          %1467 = vst.msk [vmem:[#allocation3 + $0x88] sm:$0xff] %vm341, %v1435
          %1468 = vst.msk [vmem:[#allocation3 + $0x90] sm:$0xff] %vm341, %v1436
          %1469 = vst.msk [vmem:[#allocation3 + $0x98] sm:$0xff] %vm341, %v1437
          %1470 = vst.msk [vmem:[#allocation3 + $0xa0] sm:$0xff] %vm341, %v1438
          %1471 = vst.msk [vmem:[#allocation3 + $0xa8] sm:$0xff] %vm341, %v1439
          %1472 = vst.msk [vmem:[#allocation3 + $0xb0] sm:$0xff] %vm341, %v1440
          %1473 = vst.msk [vmem:[#allocation3 + $0xb8] sm:$0xff] %vm341, %v1441
          %1474 = vst.msk [vmem:[#allocation3 + $0xc0] sm:$0xff] %vm341, %v1442
          %1475 = vst.msk [vmem:[#allocation3 + $0xc8] sm:$0xff] %vm341, %v1443
          %1476 = vst.msk [vmem:[#allocation3 + $0xd0] sm:$0xff] %vm341, %v1444
          %1477 = vst.msk [vmem:[#allocation3 + $0xd8] sm:$0xff] %vm341, %v1445
          %1478 = vst.msk [vmem:[#allocation3 + $0xe0] sm:$0xff] %vm341, %v1446
          %1479 = vst.msk [vmem:[#allocation3 + $0xe8] sm:$0xff] %vm341, %v1447
          %1480 = vst.msk [vmem:[#allocation3 + $0xf0] sm:$0xff] %vm341, %v1448
          %1481 = vst.msk [vmem:[#allocation3 + $0xf8] sm:$0xff] %vm341, %v1449
        $region52: #{tpu_custom_call.1} parent=47 // pred_fallthru
          _
        %v1482 = vld [vmem:[#allocation3] sm:$0xff]
        %v1483 = vld [vmem:[#allocation3 + $0x8] sm:$0xff]
        %v1484 = vld [vmem:[#allocation3 + $0x10] sm:$0xff]
        %v1485 = vld [vmem:[#allocation3 + $0x18] sm:$0xff]
        %v1486 = vld [vmem:[#allocation3 + $0x20] sm:$0xff]
        %v1487 = vld [vmem:[#allocation3 + $0x28] sm:$0xff]
        %v1488 = vld [vmem:[#allocation3 + $0x30] sm:$0xff]
        %v1489 = vld [vmem:[#allocation3 + $0x38] sm:$0xff]
        %v1490 = vld [vmem:[#allocation3 + $0x40] sm:$0xff]
        %v1491 = vld [vmem:[#allocation3 + $0x48] sm:$0xff]
        %v1492 = vld [vmem:[#allocation3 + $0x50] sm:$0xff]
        %v1493 = vld [vmem:[#allocation3 + $0x58] sm:$0xff]
        %v1494 = vld [vmem:[#allocation3 + $0x60] sm:$0xff]
        %v1495 = vld [vmem:[#allocation3 + $0x68] sm:$0xff]
        %v1496 = vld [vmem:[#allocation3 + $0x70] sm:$0xff]
        %v1497 = vld [vmem:[#allocation3 + $0x78] sm:$0xff]
        %v1498 = vld [vmem:[#allocation3 + $0x80] sm:$0xff]
        %v1499 = vld [vmem:[#allocation3 + $0x88] sm:$0xff]
        %v1500 = vld [vmem:[#allocation3 + $0x90] sm:$0xff]
        %v1501 = vld [vmem:[#allocation3 + $0x98] sm:$0xff]
        %v1502 = vld [vmem:[#allocation3 + $0xa0] sm:$0xff]
        %v1503 = vld [vmem:[#allocation3 + $0xa8] sm:$0xff]
        %v1504 = vld [vmem:[#allocation3 + $0xb0] sm:$0xff]
        %v1505 = vld [vmem:[#allocation3 + $0xb8] sm:$0xff]
        %v1506 = vld [vmem:[#allocation3 + $0xc0] sm:$0xff]
        %v1507 = vld [vmem:[#allocation3 + $0xc8] sm:$0xff]
        %v1508 = vld [vmem:[#allocation3 + $0xd0] sm:$0xff]
        %v1509 = vld [vmem:[#allocation3 + $0xd8] sm:$0xff]
        %v1510 = vld [vmem:[#allocation3 + $0xe0] sm:$0xff]
        %v1511 = vld [vmem:[#allocation3 + $0xe8] sm:$0xff]
        %v1512 = vld [vmem:[#allocation3 + $0xf0] sm:$0xff]
        %v1513 = vld [vmem:[#allocation3 + $0xf8] sm:$0xff]
        %v1514 = vpack.c.bf16 %v1483, %v1482
        %v1515 = vpack.c.bf16 %v1485, %v1484
        %v1516 = vpack.c.bf16 %v1487, %v1486
        %v1517 = vpack.c.bf16 %v1489, %v1488
        %v1518 = vpack.c.bf16 %v1491, %v1490
        %v1519 = vpack.c.bf16 %v1493, %v1492
        %v1520 = vpack.c.bf16 %v1495, %v1494
        %v1521 = vpack.c.bf16 %v1497, %v1496
        %v1522 = vpack.c.bf16 %v1499, %v1498
        %v1523 = vpack.c.bf16 %v1501, %v1500
        %v1524 = vpack.c.bf16 %v1503, %v1502
        %v1525 = vpack.c.bf16 %v1505, %v1504
        %v1526 = vpack.c.bf16 %v1507, %v1506
        %v1527 = vpack.c.bf16 %v1509, %v1508
        %v1528 = vpack.c.bf16 %v1511, %v1510
        %v1529 = vpack.c.bf16 %v1513, %v1512
        %v1530 = vld [vmem:[%s329] sm:$0x3]
        %vm1531 = vcmask 31744
        %v1533 = vsel %vm1531, %v1514, 0
        %v1536 = vsel %vm1531, %v1515, 0
        %v1539 = vsel %vm1531, %v1516, 0
        %v1542 = vsel %vm1531, %v1517, 0
        %v1545 = vsel %vm1531, %v1518, 0
        %v1548 = vsel %vm1531, %v1519, 0
        %v1551 = vsel %vm1531, %v1520, 0
        %v1554 = vsel %vm1531, %v1521, 0
        %v1557 = vsel %vm1531, %v1522, 0
        %v1560 = vsel %vm1531, %v1523, 0
        %v1563 = vsel %vm1531, %v1524, 0
        %v1566 = vsel %vm1531, %v1525, 0
        %v1569 = vsel %vm1531, %v1526, 0
        %v1572 = vsel %vm1531, %v1527, 0
        %v1575 = vsel %vm1531, %v1528, 0
        %v1578 = vsel %vm1531, %v1529, 0
        %vm1580 = vcmask 1041408
        %v1582 = vsel %vm1580, %v1530, 0
        %1584 = vmatprep.subr.bf16.mxu0 0
        %1585 = vmatpush1.bf16.msra.mxu0 %v1582
        %1586 = vmatprep.subr.bf16.mxu0 0
        %1587 = vmatpush1.bf16.msra.mxu0 0
        %1588 = vmatprep.subr.bf16.mxu0 0
        %1589 = vmatpush1.bf16.msra.mxu0 0
        %1590 = vmatprep.subr.bf16.mxu0 0
        %1591 = vmatpush1.bf16.msra.mxu0 0
        %1592 = vmatprep.subr.bf16.mxu0 0
        %1593 = vmatpush1.bf16.msra.mxu0 0
        %1594 = vmatprep.subr.bf16.mxu0 0
        %1595 = vmatpush1.bf16.msra.mxu0 0
        %1596 = vmatprep.subr.bf16.mxu0 0
        %1597 = vmatpush1.bf16.msra.mxu0 0
        %1598 = vmatprep.subr.bf16.mxu0 0
        %1599 = vmatpush1.bf16.msra.mxu0 0
        %1600 = vmatprep.subr.bf16.mxu0 0
        %1601 = vmatpush1.bf16.msra.mxu0 0
        %1602 = vmatprep.subr.bf16.mxu0 0
        %1603 = vmatpush1.bf16.msra.mxu0 0
        %1604 = vmatprep.subr.bf16.mxu0 0
        %1605 = vmatpush1.bf16.msra.mxu0 0
        %1606 = vmatprep.subr.bf16.mxu0 0
        %1607 = vmatpush1.bf16.msra.mxu0 0
        %1608 = vmatprep.subr.bf16.mxu0 0
        %1609 = vmatpush1.bf16.msra.mxu0 0
        %1610 = vmatprep.subr.bf16.mxu0 0
        %1611 = vmatpush1.bf16.msra.mxu0 0
        %1612 = vmatprep.subr.bf16.mxu0 0
        %1613 = vmatpush1.bf16.msra.mxu0 0
        %1614 = vmatprep.subr.bf16.mxu0 0
        %1615 = vmatpush1.bf16.msra.mxu0 0
        %1616 = vmatprep.mubr.bf16.mxu0 0
        %1617 = vmatmul.mubr.bf16.gmra.mrb[0].mxu0 %v1533
        %v1618 = vpop.f32.mrb[0].mxu0
        %v1619 = vadd.f32 0.0, %v1618
        %v1620 = vpop.f32.mrb[0].mxu0
        %v1621 = vpop.f32.mrb[0].mxu0
        %v1622 = vadd.f32 0.0, %v1621
        %v1623 = vpop.f32.mrb[0].mxu0
        %1624 = vmatprep.mubr.bf16.mxu0 0
        %1625 = vmatmul.mubr.bf16.gmra.mrb[0].mxu0 %v1536
        %v1626 = vpop.f32.mrb[0].mxu0
        %v1627 = vadd.f32 0.0, %v1626
        %v1628 = vpop.f32.mrb[0].mxu0
        %v1629 = vpop.f32.mrb[0].mxu0
        %v1630 = vadd.f32 0.0, %v1629
        %v1631 = vpop.f32.mrb[0].mxu0
        %1632 = vmatprep.mubr.bf16.mxu0 0
        %1633 = vmatmul.mubr.bf16.gmra.mrb[0].mxu0 %v1539
        %v1634 = vpop.f32.mrb[0].mxu0
        %v1635 = vadd.f32 0.0, %v1634
        %v1636 = vpop.f32.mrb[0].mxu0
        %v1637 = vpop.f32.mrb[0].mxu0
        %v1638 = vadd.f32 0.0, %v1637
        %v1639 = vpop.f32.mrb[0].mxu0
        %1640 = vmatprep.mubr.bf16.mxu0 0
        %1641 = vmatmul.mubr.bf16.gmra.mrb[0].mxu0 %v1542
        %v1642 = vpop.f32.mrb[0].mxu0
        %v1643 = vadd.f32 0.0, %v1642
        %v1644 = vpop.f32.mrb[0].mxu0
        %v1645 = vpop.f32.mrb[0].mxu0
        %v1646 = vadd.f32 0.0, %v1645
        %v1647 = vpop.f32.mrb[0].mxu0
        %1648 = vmatprep.mubr.bf16.mxu0 0
        %1649 = vmatmul.mubr.bf16.gmra.mrb[0].mxu0 %v1545
        %v1650 = vpop.f32.mrb[0].mxu0
        %v1651 = vadd.f32 0.0, %v1650
        %v1652 = vpop.f32.mrb[0].mxu0
        %v1653 = vpop.f32.mrb[0].mxu0
        %v1654 = vadd.f32 0.0, %v1653
        %v1655 = vpop.f32.mrb[0].mxu0
        %1656 = vmatprep.mubr.bf16.mxu0 0
        %1657 = vmatmul.mubr.bf16.gmra.mrb[0].mxu0 %v1548
        %v1658 = vpop.f32.mrb[0].mxu0
        %v1659 = vadd.f32 0.0, %v1658
        %v1660 = vpop.f32.mrb[0].mxu0
        %v1661 = vpop.f32.mrb[0].mxu0
        %v1662 = vadd.f32 0.0, %v1661
        %v1663 = vpop.f32.mrb[0].mxu0
        %1664 = vmatprep.mubr.bf16.mxu0 0
        %1665 = vmatmul.mubr.bf16.gmra.mrb[0].mxu0 %v1551
        %v1666 = vpop.f32.mrb[0].mxu0
        %v1667 = vadd.f32 0.0, %v1666
        %v1668 = vpop.f32.mrb[0].mxu0
        %v1669 = vpop.f32.mrb[0].mxu0
        %v1670 = vadd.f32 0.0, %v1669
        %v1671 = vpop.f32.mrb[0].mxu0
        %1672 = vmatprep.mubr.bf16.mxu0 0
        %1673 = vmatmul.mubr.bf16.gmra.mrb[0].mxu0 %v1554
        %v1674 = vpop.f32.mrb[0].mxu0
        %v1675 = vadd.f32 0.0, %v1674
        %v1676 = vpop.f32.mrb[0].mxu0
        %v1677 = vpop.f32.mrb[0].mxu0
        %v1678 = vadd.f32 0.0, %v1677
        %v1679 = vpop.f32.mrb[0].mxu0
        %1680 = vmatprep.mubr.bf16.mxu0 0
        %1681 = vmatmul.mubr.bf16.gmra.mrb[0].mxu0 %v1557
        %v1682 = vpop.f32.mrb[0].mxu0
        %v1683 = vadd.f32 0.0, %v1682
        %v1684 = vpop.f32.mrb[0].mxu0
        %v1685 = vpop.f32.mrb[0].mxu0
        %v1686 = vadd.f32 0.0, %v1685
        %v1687 = vpop.f32.mrb[0].mxu0
        %1688 = vmatprep.mubr.bf16.mxu0 0
        %1689 = vmatmul.mubr.bf16.gmra.mrb[0].mxu0 %v1560
        %v1690 = vpop.f32.mrb[0].mxu0
        %v1691 = vadd.f32 0.0, %v1690
        %v1692 = vpop.f32.mrb[0].mxu0
        %v1693 = vpop.f32.mrb[0].mxu0
        %v1694 = vadd.f32 0.0, %v1693
        %v1695 = vpop.f32.mrb[0].mxu0
        %1696 = vmatprep.mubr.bf16.mxu0 0
        %1697 = vmatmul.mubr.bf16.gmra.mrb[0].mxu0 %v1563
        %v1698 = vpop.f32.mrb[0].mxu0
        %v1699 = vadd.f32 0.0, %v1698
        %v1700 = vpop.f32.mrb[0].mxu0
        %v1701 = vpop.f32.mrb[0].mxu0
        %v1702 = vadd.f32 0.0, %v1701
        %v1703 = vpop.f32.mrb[0].mxu0
        %1704 = vmatprep.mubr.bf16.mxu0 0
        %1705 = vmatmul.mubr.bf16.gmra.mrb[0].mxu0 %v1566
        %v1706 = vpop.f32.mrb[0].mxu0
        %v1707 = vadd.f32 0.0, %v1706
        %v1708 = vpop.f32.mrb[0].mxu0
        %v1709 = vpop.f32.mrb[0].mxu0
        %v1710 = vadd.f32 0.0, %v1709
        %v1711 = vpop.f32.mrb[0].mxu0
        %1712 = vmatprep.mubr.bf16.mxu0 0
        %1713 = vmatmul.mubr.bf16.gmra.mrb[0].mxu0 %v1569
        %v1714 = vpop.f32.mrb[0].mxu0
        %v1715 = vadd.f32 0.0, %v1714
        %v1716 = vpop.f32.mrb[0].mxu0
        %v1717 = vpop.f32.mrb[0].mxu0
        %v1718 = vadd.f32 0.0, %v1717
        %v1719 = vpop.f32.mrb[0].mxu0
        %1720 = vmatprep.mubr.bf16.mxu0 0
        %1721 = vmatmul.mubr.bf16.gmra.mrb[0].mxu0 %v1572
        %v1722 = vpop.f32.mrb[0].mxu0
        %v1723 = vadd.f32 0.0, %v1722
        %v1724 = vpop.f32.mrb[0].mxu0
        %v1725 = vpop.f32.mrb[0].mxu0
        %v1726 = vadd.f32 0.0, %v1725
        %v1727 = vpop.f32.mrb[0].mxu0
        %1728 = vmatprep.mubr.bf16.mxu0 0
        %1729 = vmatmul.mubr.bf16.gmra.mrb[0].mxu0 %v1575
        %v1730 = vpop.f32.mrb[0].mxu0
        %v1731 = vadd.f32 0.0, %v1730
        %v1732 = vpop.f32.mrb[0].mxu0
        %v1733 = vpop.f32.mrb[0].mxu0
        %v1734 = vadd.f32 0.0, %v1733
        %v1735 = vpop.f32.mrb[0].mxu0
        %1736 = vmatprep.mubr.bf16.mxu0 0
        %1737 = vmatmul.mubr.bf16.gmra.mrb[0].mxu0 %v1578
        %v1738 = vpop.f32.mrb[0].mxu0
        %v1739 = vadd.f32 0.0, %v1738
        %v1740 = vpop.f32.mrb[0].mxu0
        %v1741 = vpop.f32.mrb[0].mxu0
        %v1742 = vadd.f32 0.0, %v1741
        %v1743 = vpop.f32.mrb[0].mxu0
        %1744 = vdwg.mxu0
        %v1745 = vld [vmem:[%s332] sm:$0x1]
        %v1747 = vlaneseq
        %v1748 = vshrl.u32 %v1747, 7
        %v1749 = vsub.s32 0, %v1748
        %v1750 = vrot.slane %v1745, %v1749
        %v1752 = vmul.f32 %v1619, %v1750
        %v1753 = vmul.f32 %v1622, %v1750
        %v1754 = vmul.f32 %v1627, %v1750
        %v1755 = vmul.f32 %v1630, %v1750
        %v1756 = vmul.f32 %v1635, %v1750
        %v1757 = vmul.f32 %v1638, %v1750
        %v1758 = vmul.f32 %v1643, %v1750
        %v1759 = vmul.f32 %v1646, %v1750
        %v1760 = vmul.f32 %v1651, %v1750
        %v1761 = vmul.f32 %v1654, %v1750
        %v1762 = vmul.f32 %v1659, %v1750
        %v1763 = vmul.f32 %v1662, %v1750
        %v1764 = vmul.f32 %v1667, %v1750
        %v1765 = vmul.f32 %v1670, %v1750
        %v1766 = vmul.f32 %v1675, %v1750
        %v1767 = vmul.f32 %v1678, %v1750
        %v1768 = vmul.f32 %v1683, %v1750
        %v1769 = vmul.f32 %v1686, %v1750
        %v1770 = vmul.f32 %v1691, %v1750
        %v1771 = vmul.f32 %v1694, %v1750
        %v1772 = vmul.f32 %v1699, %v1750
        %v1773 = vmul.f32 %v1702, %v1750
        %v1774 = vmul.f32 %v1707, %v1750
        %v1775 = vmul.f32 %v1710, %v1750
        %v1776 = vmul.f32 %v1715, %v1750
        %v1777 = vmul.f32 %v1718, %v1750
        %v1778 = vmul.f32 %v1723, %v1750
        %v1779 = vmul.f32 %v1726, %v1750
        %v1780 = vmul.f32 %v1731, %v1750
        %v1781 = vmul.f32 %v1734, %v1750
        %v1782 = vmul.f32 %v1739, %v1750
        %v1783 = vmul.f32 %v1742, %v1750
        %v1784 = vld [vmem:[%s335] sm:$0x1]
        %v1786 = vlaneseq
        %v1787 = vshrl.u32 %v1786, 7
        %v1788 = vsub.s32 0, %v1787
        %v1789 = vrot.slane %v1784, %v1788
        %v1791 = vadd.f32 %v1752, %v1789
        %v1792 = vadd.f32 %v1753, %v1789
        %v1793 = vadd.f32 %v1754, %v1789
        %v1794 = vadd.f32 %v1755, %v1789
        %v1795 = vadd.f32 %v1756, %v1789
        %v1796 = vadd.f32 %v1757, %v1789
        %v1797 = vadd.f32 %v1758, %v1789
        %v1798 = vadd.f32 %v1759, %v1789
        %v1799 = vadd.f32 %v1760, %v1789
        %v1800 = vadd.f32 %v1761, %v1789
        %v1801 = vadd.f32 %v1762, %v1789
        %v1802 = vadd.f32 %v1763, %v1789
        %v1803 = vadd.f32 %v1764, %v1789
        %v1804 = vadd.f32 %v1765, %v1789
        %v1805 = vadd.f32 %v1766, %v1789
        %v1806 = vadd.f32 %v1767, %v1789
        %v1807 = vadd.f32 %v1768, %v1789
        %v1808 = vadd.f32 %v1769, %v1789
        %v1809 = vadd.f32 %v1770, %v1789
        %v1810 = vadd.f32 %v1771, %v1789
        %v1811 = vadd.f32 %v1772, %v1789
        %v1812 = vadd.f32 %v1773, %v1789
        %v1813 = vadd.f32 %v1774, %v1789
        %v1814 = vadd.f32 %v1775, %v1789
        %v1815 = vadd.f32 %v1776, %v1789
        %v1816 = vadd.f32 %v1777, %v1789
        %v1817 = vadd.f32 %v1778, %v1789
        %v1818 = vadd.f32 %v1779, %v1789
        %v1819 = vadd.f32 %v1780, %v1789
        %v1820 = vadd.f32 %v1781, %v1789
        %v1821 = vadd.f32 %v1782, %v1789
        %v1822 = vadd.f32 %v1783, %v1789
        %v1823 = vmax.f32 %v1791, 0.0
        %v1824 = vmax.f32 %v1792, 0.0
        %v1825 = vmax.f32 %v1793, 0.0
        %v1826 = vmax.f32 %v1794, 0.0
        %v1827 = vmax.f32 %v1795, 0.0
        %v1828 = vmax.f32 %v1796, 0.0
        %v1829 = vmax.f32 %v1797, 0.0
        %v1830 = vmax.f32 %v1798, 0.0
        %v1831 = vmax.f32 %v1799, 0.0
        %v1832 = vmax.f32 %v1800, 0.0
        %v1833 = vmax.f32 %v1801, 0.0
        %v1834 = vmax.f32 %v1802, 0.0
        %v1835 = vmax.f32 %v1803, 0.0
        %v1836 = vmax.f32 %v1804, 0.0
        %v1837 = vmax.f32 %v1805, 0.0
        %v1838 = vmax.f32 %v1806, 0.0
        %v1839 = vmax.f32 %v1807, 0.0
        %v1840 = vmax.f32 %v1808, 0.0
        %v1841 = vmax.f32 %v1809, 0.0
        %v1842 = vmax.f32 %v1810, 0.0
        %v1843 = vmax.f32 %v1811, 0.0
        %v1844 = vmax.f32 %v1812, 0.0
        %v1845 = vmax.f32 %v1813, 0.0
        %v1846 = vmax.f32 %v1814, 0.0
        %v1847 = vmax.f32 %v1815, 0.0
        %v1848 = vmax.f32 %v1816, 0.0
        %v1849 = vmax.f32 %v1817, 0.0
        %v1850 = vmax.f32 %v1818, 0.0
        %v1851 = vmax.f32 %v1819, 0.0
        %v1852 = vmax.f32 %v1820, 0.0
        %v1853 = vmax.f32 %v1821, 0.0
        %v1854 = vmax.f32 %v1822, 0.0
        %1855 = vst [vmem:[%s320] sm:$0xff] %v1823
        %1856 = vst [vmem:[%s320 + $0x8] sm:$0xff] %v1824
        %1857 = vst [vmem:[%s320 + $0x10] sm:$0xff] %v1825
        %1858 = vst [vmem:[%s320 + $0x18] sm:$0xff] %v1826
        %1859 = vst [vmem:[%s320 + $0x20] sm:$0xff] %v1827
        %1860 = vst [vmem:[%s320 + $0x28] sm:$0xff] %v1828
        %1861 = vst [vmem:[%s320 + $0x30] sm:$0xff] %v1829
        %1862 = vst [vmem:[%s320 + $0x38] sm:$0xff] %v1830
        %1863 = vst [vmem:[%s320 + $0x40] sm:$0xff] %v1831
        %1864 = vst [vmem:[%s320 + $0x48] sm:$0xff] %v1832
        %1865 = vst [vmem:[%s320 + $0x50] sm:$0xff] %v1833
        %1866 = vst [vmem:[%s320 + $0x58] sm:$0xff] %v1834
        %1867 = vst [vmem:[%s320 + $0x60] sm:$0xff] %v1835
        %1868 = vst [vmem:[%s320 + $0x68] sm:$0xff] %v1836
        %1869 = vst [vmem:[%s320 + $0x70] sm:$0xff] %v1837
        %1870 = vst [vmem:[%s320 + $0x78] sm:$0xff] %v1838
        %1871 = vst [vmem:[%s320 + $0x80] sm:$0xff] %v1839
        %1872 = vst [vmem:[%s320 + $0x88] sm:$0xff] %v1840
        %1873 = vst [vmem:[%s320 + $0x90] sm:$0xff] %v1841
        %1874 = vst [vmem:[%s320 + $0x98] sm:$0xff] %v1842
        %1875 = vst [vmem:[%s320 + $0xa0] sm:$0xff] %v1843
        %1876 = vst [vmem:[%s320 + $0xa8] sm:$0xff] %v1844
        %1877 = vst [vmem:[%s320 + $0xb0] sm:$0xff] %v1845
        %1878 = vst [vmem:[%s320 + $0xb8] sm:$0xff] %v1846
        %1879 = vst [vmem:[%s320 + $0xc0] sm:$0xff] %v1847
        %1880 = vst [vmem:[%s320 + $0xc8] sm:$0xff] %v1848
        %1881 = vst [vmem:[%s320 + $0xd0] sm:$0xff] %v1849
        %1882 = vst [vmem:[%s320 + $0xd8] sm:$0xff] %v1850
        %1883 = vst [vmem:[%s320 + $0xe0] sm:$0xff] %v1851
        %1884 = vst [vmem:[%s320 + $0xe8] sm:$0xff] %v1852
        %1885 = vst [vmem:[%s320 + $0xf0] sm:$0xff] %v1853
        %1886 = vst [vmem:[%s320 + $0xf8] sm:$0xff] %v1854
        %s1887 = sand.u32 %s210, 1
        %s1888 = scalar_lea.sflag [#allocation5], %s1887
        %s1889 = sand.u32 %s210, 1
        %s1890 = smul.addr %s1889, 256
        %s1891 = scalar_lea.vmem [#allocation4], %s1890
        // Predicated region
        $region53: #{tpu_custom_call.1} parent=47 // pred_check
          %p1892 = pneg %p220
        $region54: #{tpu_custom_call.1} parent=47 // pred_check_branch
          %1894 = sbr.rel (%p1892) target = $region56
        $region55: #{tpu_custom_call.1} parent=47 // pred_region
          %s1896 = ssub.s32 4096, 4096
          %1897 = vsyncadd %s1888, %s1896
          %s1898 = smul.addr %s25, 32
          %s1899 = sadd.s32 %s26, %s1898
          %s1900 = smul.addr %s1899, 128
          %s1901 = scalar_lea.hbm %s7, %s1900
          %s1902 = sshll.u32 %s1891, 4
          %s1903 = int_to_ptr.vmem [resolvable:$true] %s1902
          %1908 = dma.vmem_to_hbm [thread:$0]  %s1903, 4096, %s1901, %s1888, 128, 128, 8
        $region56: #{tpu_custom_call.1} parent=47 // pred_fallthru
          _
      $region48: #{tpu_custom_call.1} parent=5 // pred_fallthru
        _
      %p1909 = scmp.le.s32.totalorder 2, %s16
      // Predicated region
      $region57: #{tpu_custom_call.1} parent=5 // pred_check
        %p1910 = pneg %p1909
      $region58: #{tpu_custom_call.1} parent=5 // pred_check_branch
        %1912 = sbr.rel (%p1910) target = $region60
      $region59: #{tpu_custom_call.1} parent=5 // pred_region
        %s1913 = ssub.s32 %s16, 2
        // Predicated region
        $region61: #{tpu_custom_call.1} parent=59 // pred_check
          %p1914 = pneg %p226
        $region62: #{tpu_custom_call.1} parent=59 // pred_check_branch
          %1916 = sbr.rel (%p1914) target = $region64
        $region63: #{tpu_custom_call.1} parent=59 // pred_region
          %s1917 = sand.u32 %s211, 1
          %s1918 = scalar_lea.sflag [#allocation5], %s1917
          %s1919 = sand.u32 %s211, 1
          %s1920 = smul.addr %s1919, 256
          %s1921 = scalar_lea.vmem [#allocation4], %s1920
          %1922 = dma.done %s1918, 4096
        $region64: #{tpu_custom_call.1} parent=59 // pred_fallthru
          _
      $region60: #{tpu_custom_call.1} parent=5 // pred_fallthru
        _
    $region6: #{tpu_custom_call.1} parent=1 // loop_footer
      %s20 = sadd.s32 1, %s16
    $region7: #{tpu_custom_call.1} parent=1 // loop_footer_branch
      %15 = sbr.rel target = $region3
    $region8: #{tpu_custom_call.1} parent=1 // loop_exit
      _
    %1923 = vsyncpa [#allocation5], 1
    %s1924 = scalar_lea.sflag [#allocation5], 1
    %1925 = vsyncpa %s1924, 1

</llo_original>
